<compile_context>
chip_gen: v6e
topology: v6e:2x2x1
jax: 0.10.0
libtpu: 0.0.40
codegen_flags: <defaults>
</compile_context>

<pallas_src>
import functools

import jax
import jax.numpy as jnp
from jax import lax
from jax.experimental import pallas as pl
from jax.experimental.pallas import tpu as pltpu


def _round_up(x, m):
    return (x + m - 1) // m * m


def _cdiv(a, b):
    return -(-a // b)


def _vmem_capacity_bytes():
    """Physical VMEM per TensorCore (64 MiB on v7x, 128 MiB on v5e/v6e)."""
    try:
        cap = int(pltpu.get_tpu_info().vmem_capacity_bytes)
        if cap > 0:
            return cap
    except Exception:
        pass
    return 64 * 1024 * 1024  # conservative default (fits every generation)


def _plan(B, Tp, K1p, Dp, Cp, M):
    """Pick batch tile / table residency / vmem limit from hardware VMEM."""
    cap = _vmem_capacity_bytes()
    budget = int(cap * 0.70)       # tiles are sized against ~70% of VMEM
    vmem_limit = int(cap * 0.85)   # compile limit keeps 15% headroom
    itemsize = 4                   # f32 / i32 everywhere (exactness)

    emb_resident_bytes = M * K1p * Dp * itemsize
    emb_resident = emb_resident_bytes <= budget // 3

    # Constant blocks, budgeted at 2 buffers in case Buffered(1) falls back.
    fixed = 2 * (emb_resident_bytes if emb_resident else K1p * Dp * itemsize)
    fixed += 2 * Dp * Cp * itemsize                  # classifier weight
    fixed += 2 * (8 * Dp + 8 * Cp) * itemsize        # biases (8-sublane pad)

    def tile_bytes(tb):
        rows = tb * Tp
        acc = rows * Dp * itemsize                   # VMEM accumulator scratch
        onehot = rows * K1p * itemsize               # compute temporary
        xtmp = rows * Dp * itemsize                  # finalize temporary
        idx = 2 * rows * 128 * itemsize              # (rows,1) i32 -> 128 lanes
        msk = 2 * tb * max(Tp, 128) * itemsize
        out = 2 * tb * Cp * itemsize
        return acc + onehot + xtmp + idx + msk + out

    # Enough rows to fill the MXU; allow more when tables must stream so the
    # per-tile re-DMA of each table is amortized over a bigger batch tile.
    row_cap = 512 if emb_resident else 2048
    tb = 8
    while (tb + 8) * Tp <= row_cap and fixed + tile_bytes(tb + 8) <= budget:
        tb += 8

    # Batch handling: pad B up to a multiple of the tile; keep >= 2 tiles when
    # the batch allows it so the "parallel" axis can shard over v7x's 2 TCs.
    if B <= tb:
        tb = _round_up(_cdiv(B, 2), 8) if B >= 16 else _round_up(B, 8)
    Bp = _round_up(B, tb)
    nbt = Bp // tb
    return tb, Bp, nbt, emb_resident, vmem_limit


def _qfc_kernel(idx_ref, mask_ref, emb_ref, bias_ref, w_ref, bcls_ref,
                logits_ref, acc_ref, *, emb_resident):
    # grid = (batch_tile b, codebook m); m is the reduction axis (last).
    m = pl.program_id(1)
    last_m = pl.num_programs(1) - 1

    rows, Dp = acc_ref.shape          # rows = TILE_B * Tp
    K1p = emb_ref.shape[1]
    TB, Tp = mask_ref.shape

    @pl.when(m == 0)
    def _init():
        acc_ref[...] = jnp.zeros_like(acc_ref)

    # ---- re-embedding for codebook m via one-hot @ table (MXU) ----
    # indices are pre-flattened to (rows, 1) so the one-hot is built directly
    # against a 2D iota (cheap lane broadcast, no relayout).
    idx = idx_ref[0]                                            # (rows, 1) i32
    iota_k = lax.broadcasted_iota(jnp.int32, (rows, K1p), 1)
    onehot = (idx == iota_k).astype(jnp.float32)
    table = emb_ref[m] if emb_resident else emb_ref[0]          # (K1p, Dp)
    acc_ref[...] += jnp.dot(onehot, table,
                            preferred_element_type=jnp.float32)

    # ---- finalize on the last codebook step ----
    @pl.when(m == last_m)
    def _finalize():
        # merge_word = 'sum_tanh'
        x = jnp.tanh(acc_ref[...] + bias_ref[...])              # (rows, Dp)
        # Tp % 8 == 0 -> this sublane regroup is layout-free.
        x = x.reshape(TB, Tp, Dp)
        # Pooler: masked mean (mask is pre-scaled by 1/len in the wrapper).
        pooled = jnp.sum(x * mask_ref[...][:, :, None], axis=1)  # (TB, Dp)
        # Classifier: linear (padded cols of W/b are zero -> exact).
        logits_ref[...] = (jnp.dot(pooled, w_ref[...],
                                   preferred_element_type=jnp.float32)
                           + bcls_ref[...])


@functools.partial(jax.jit,
                   static_argnames=("num_classes", "single_buffer_params"))
def _forward_impl(idx_mbt, mask_bt, labels_b, emb_p, bias_p, w_p, bcls_p,
                  *, num_classes, single_buffer_params):
    M, B, T = idx_mbt.shape
    K1p, Dp = emb_p.shape[1], emb_p.shape[2]
    Cp = w_p.shape[1]
    Tp = _round_up(T, 8)

    TB, Bp, nbt, emb_resident, vmem_limit = _plan(B, Tp, K1p, Dp, Cp, M)

    # ---- activation layout prep (zero padding is exact: index 0 maps to the
    # padding row of every table and padded mask entries are 0) ----
    idx_pad = jnp.zeros((M, Bp, Tp), jnp.int32)
    idx_pad = idx_pad.at[:, :B, :T].set(idx_mbt.astype(jnp.int32))
    idx_flat = idx_pad.reshape(M, Bp * Tp, 1)

    # NOTE: the max(.,1) guard only differs from the reference for an
    # all-padded sequence (reference would produce NaN/Inf there).
    denom = jnp.maximum(jnp.sum(mask_bt, axis=1, keepdims=True), 1.0)
    mask_scaled = (mask_bt / denom).astype(jnp.float32)
    mask_p = jnp.zeros((Bp, Tp), jnp.float32).at[:B, :T].set(mask_scaled)

    use_buffered = single_buffer_params and hasattr(pl, "Buffered")

    def const_spec(shape):
        zeros = (0,) * len(shape)
        idx_map = lambda b, m: zeros
        if use_buffered:
            return pl.BlockSpec(shape, idx_map, pipeline_mode=pl.Buffered(1))
        return pl.BlockSpec(shape, idx_map)

    if emb_resident:
        # Whole stacked table stays in VMEM; no re-DMA per batch tile.
        emb_spec = const_spec((M, K1p, Dp))
    else:
        # TODO(synk): sweep pipeline_mode=pl.Buffered(3) on this streamed block
        #             if the per-step table DMA is exposed at production sizes.
        emb_spec = pl.BlockSpec((1, K1p, Dp), lambda b, m: (m, 0, 0))

    kernel = functools.partial(_qfc_kernel, emb_resident=emb_resident)

    logits_p = pl.pallas_call(
        kernel,
        out_shape=jax.ShapeDtypeStruct((Bp, Cp), jnp.float32),
        grid=(nbt, M),
        in_specs=[
            pl.BlockSpec((1, TB * Tp, 1), lambda b, m: (m, b, 0)),  # indices
            pl.BlockSpec((TB, Tp), lambda b, m: (b, 0)),            # mask/len
            emb_spec,                                               # tables
            const_spec((1, Dp)),                                    # merge bias
            const_spec((Dp, Cp)),                                   # W
            const_spec((1, Cp)),                                    # b
        ],
        out_specs=pl.BlockSpec((TB, Cp), lambda b, m: (b, 0)),      # logits
        scratch_shapes=[pltpu.VMEM((TB * Tp, Dp), jnp.float32)],
        compiler_params=pltpu.CompilerParams(
            dimension_semantics=("parallel", "arbitrary"),
            vmem_limit_bytes=vmem_limit),
    )(idx_flat, mask_p, emb_p, bias_p, w_p, bcls_p)

    # ---- pred / CE loss from the lane-dense logits (trivial XLA ops) ----
    logits = logits_p[:B, :num_classes]
    pred = jnp.argmax(logits, axis=-1).astype(jnp.int32)
    lse = jax.scipy.special.logsumexp(logits, axis=-1)
    # NOTE: labels are assumed to lie in [0, num_classes), as in the reference.
    picked = jnp.take_along_axis(
        logits, labels_b.astype(jnp.int32)[:, None], axis=-1)[:, 0]
    loss = jnp.sum(lse - picked)          # CrossEntropyLoss(reduction='sum')
    return {"logits": logits, "pred": pred, "loss": loss}


def prepare_params(emb_tables, merge_bias, w_cls, b_cls):
    """One-time padding of parameters to TPU-friendly shapes.

    Hoisted out of the per-call path; padded rows/cols are zero (exact) and
    must stay zero for the kernel's padded matmuls to remain exact.
    """
    M, K1, D = emb_tables.shape
    C = w_cls.shape[1]
    K1p, Dp, Cp = _round_up(K1, 8), _round_up(D, 128), _round_up(C, 128)
    emb_p = jnp.zeros((M, K1p, Dp), jnp.float32).at[:, :K1, :D].set(
        emb_tables.astype(jnp.float32))
    bias_p = jnp.zeros((1, Dp), jnp.float32).at[0, :D].set(
        merge_bias.astype(jnp.float32))
    w_p = jnp.zeros((Dp, Cp), jnp.float32).at[:D, :C].set(
        w_cls.astype(jnp.float32))
    bcls_p = jnp.zeros((1, Cp), jnp.float32).at[0, :C].set(
        b_cls.astype(jnp.float32))
    return (emb_p, bias_p, w_p, bcls_p), C


def quantizer_for_classification_fwd(idx_mbt, mask_bt, labels_b, params,
                                     num_classes):
    emb_p, bias_p, w_p, bcls_p = params
    try:
        out = _forward_impl(idx_mbt, mask_bt, labels_b, emb_p, bias_p, w_p,
                            bcls_p, num_classes=num_classes,
                            single_buffer_params=True)
        jax.block_until_ready(out)
        return out
    except Exception:
        # pl.Buffered(1) (single-buffered constant parameter blocks) is not
        # supported on this JAX/Mosaic version -> default double buffering.
        out = _forward_impl(idx_mbt, mask_bt, labels_b, emb_p, bias_p, w_p,
                            bcls_p, num_classes=num_classes,
                            single_buffer_params=False)
        jax.block_until_ready(out)
        return out


def _reference(indices_mbt, mask_bt, labels_b, emb_tables, merge_bias,
               w_cls, b_cls):
    M, B, T = indices_mbt.shape
    embs = jnp.stack([emb_tables[m][indices_mbt[m]] for m in range(M)], axis=-2)
    x = jnp.tanh(jnp.sum(embs, axis=-2) + merge_bias)
    pooled = jnp.sum(x * mask_bt[:, :, None], axis=1) / jnp.sum(
        mask_bt, axis=1, keepdims=True)
    logits = pooled @ w_cls + b_cls
    pred = jnp.argmax(logits, axis=-1)
    lse = jax.scipy.special.logsumexp(logits, axis=-1)
    picked = jnp.take_along_axis(logits, labels_b[:, None], axis=-1)[:, 0]
    loss = jnp.sum(lse - picked)
    return logits, pred, loss


if __name__ == "__main__":
    B, T, M, K, D, C = 16, 8, 2, 16, 32, 4
    K1 = K + 1  # +1 for padding row (padding_idx=0)

    key = jax.random.PRNGKey(0)
    k_idx, k_emb, k_bias, k_w, k_b, k_lab, k_len = jax.random.split(key, 7)

    # Synthetic encoder output: codes in [0, K); padded positions marked -1.
    raw_idx = jax.random.randint(k_idx, (B, T, M), 0, K, dtype=jnp.int32)
    lengths = jax.random.randint(k_len, (B,), 1, T + 1, dtype=jnp.int32)
    pos = jnp.arange(T)[None, :]
    nopad_mask = (pos < lengths[:, None]).astype(jnp.float32)          # [B, T]
    raw_idx = jnp.where(nopad_mask[:, :, None] > 0, raw_idx, -1)
    # word-level: idx + 1, so padding maps to row 0 of each embedding table.
    idx_mbt = jnp.transpose(raw_idx + 1, (2, 0, 1)).astype(jnp.int32)  # [M, B, T]

    # Parameters (deterministic init). Row 0 of each table zeroed (padding_idx=0).
    emb_tables = 0.1 * jax.random.normal(k_emb, (M, K1, D), jnp.float32)
    emb_tables = emb_tables.at[:, 0, :].set(0.0)
    merge_bias = 0.1 * jax.random.normal(k_bias, (D,), jnp.float32)
    w_cls = 0.1 * jax.random.normal(k_w, (D, C), jnp.float32)
    b_cls = 0.1 * jax.random.normal(k_b, (C,), jnp.float32)
    labels = jax.random.randint(k_lab, (B,), 0, C, dtype=jnp.int32)

    # Parameter padding hoisted out of the per-call hot path.
    params, n_cls = prepare_params(emb_tables, merge_bias, w_cls, b_cls)

    out = quantizer_for_classification_fwd(idx_mbt, nopad_mask, labels,
                                           params, n_cls)
    jax.block_until_ready(out)

    ref_logits, ref_pred, ref_loss = _reference(idx_mbt, nopad_mask, labels,
                                                emb_tables, merge_bias,
                                                w_cls, b_cls)
    assert jnp.allclose(out["logits"], ref_logits, atol=1e-5, rtol=1e-5)
    assert jnp.array_equal(out["pred"], ref_pred)
    assert jnp.allclose(out["loss"], ref_loss, atol=1e-4, rtol=1e-5)

    print("KERNEL_OK")
</pallas_src>

<mosaic_0001>
module attributes {stable_mosaic.version = 11 : i64} {
  func.func @_qfc_kernel(%arg0: i32, %arg1: i32, %arg2: memref<1x64x1xi32, #tpu.memory_space<vmem>>, %arg3: memref<8x8xf32, #tpu.memory_space<vmem>>, %arg4: memref<2x24x128xf32, #tpu.memory_space<vmem>>, %arg5: memref<1x128xf32, #tpu.memory_space<vmem>>, %arg6: memref<128x128xf32, #tpu.memory_space<vmem>>, %arg7: memref<1x128xf32, #tpu.memory_space<vmem>>, %arg8: memref<8x128xf32, #tpu.memory_space<vmem>>, %arg9: memref<64x128xf32, #tpu.memory_space<vmem>>) attributes {dimension_semantics = [#tpu.dimension_semantics<parallel>, #tpu.dimension_semantics<arbitrary>], iteration_bounds = array<i64: 2, 2>, scalar_prefetch = 0 : i64, scratch_operands = 1 : i64, tpu.core_type = #tpu.core_type<tc>, window_params = [{transform_indices = @transform_0, window_bounds = array<i64: 1, 64, 1>}, {transform_indices = @transform_1, window_bounds = array<i64: 8, 8>}, {pipeline_mode = #tpu.pipeline_mode<synchronous>, transform_indices = @transform_2, window_bounds = array<i64: 2, 24, 128>}, {pipeline_mode = #tpu.pipeline_mode<synchronous>, transform_indices = @transform_3, window_bounds = array<i64: 1, 128>}, {pipeline_mode = #tpu.pipeline_mode<synchronous>, transform_indices = @transform_4, window_bounds = array<i64: 128, 128>}, {pipeline_mode = #tpu.pipeline_mode<synchronous>, transform_indices = @transform_5, window_bounds = array<i64: 1, 128>}, {transform_indices = @transform_6, window_bounds = array<i64: 8, 128>}]} {
    %c0_i32 = arith.constant 0 : i32
    %0 = arith.cmpi eq, %arg1, %c0_i32 : i32
    %1 = arith.extui %0 : i1 to i32
    %c0_i32_0 = arith.constant 0 : i32
    %2 = arith.cmpi ne, %1, %c0_i32_0 : i32
    scf.if %2 {
      %cst_10 = arith.constant 0.000000e+00 : f32
      %20 = vector.broadcast %cst_10 : f32 to vector<64x128xf32>
      %c0_11 = arith.constant 0 : index
      %c0_12 = arith.constant 0 : index
      %21 = vector.load %arg9[%c0_11, %c0_12] : memref<64x128xf32, #tpu.memory_space<vmem>>, vector<64x128xf32>
      tpu.vector_store %arg9[%c0_11, %c0_12], %20 {strides = array<i32>} : memref<64x128xf32, #tpu.memory_space<vmem>>, vector<64x128xf32>,
    } else {
    }
    %c0 = arith.constant 0 : index
    %c0_1 = arith.constant 0 : index
    %c0_2 = arith.constant 0 : index
    %3 = vector.load %arg2[%c0, %c0_1, %c0_2] : memref<1x64x1xi32, #tpu.memory_space<vmem>>, vector<1x64x1xi32>
    %4 = vector.shape_cast %3 : vector<1x64x1xi32> to vector<64x1xi32>
    %5 = tpu.iota {dimensions = array<i32: 1>} : vector<64x24xi32>
    %6 = vector.broadcast %4 : vector<64x1xi32> to vector<64x24xi32>
    %7 = arith.cmpi eq, %6, %5 : vector<64x24xi32>
    %8 = arith.extui %7 : vector<64x24xi1> to vector<64x24xi32>
    %9 = arith.sitofp %8 : vector<64x24xi32> to vector<64x24xf32>
    %10 = arith.index_cast %arg1 : i32 to index
    %c0_3 = arith.constant 0 : index
    %c0_4 = arith.constant 0 : index
    %11 = vector.load %arg4[%10, %c0_3, %c0_4] : memref<2x24x128xf32, #tpu.memory_space<vmem>>, vector<1x24x128xf32>
    %12 = vector.shape_cast %11 : vector<1x24x128xf32> to vector<24x128xf32>
    %c0_5 = arith.constant 0 : index
    %c0_6 = arith.constant 0 : index
    %13 = vector.load %arg9[%c0_5, %c0_6] : memref<64x128xf32, #tpu.memory_space<vmem>>, vector<64x128xf32>
    %cst = arith.constant dense<0.000000e+00> : vector<64x128xf32>
    %14 = tpu.matmul %9, %12, %cst {dimension_numbers = #tpu.dot_dimension_numbers<[1], [0], [0], [1], [0, 0, 1, 1], [], []>} : vector<64x24xf32>, vector<24x128xf32>, vector<64x128xf32> -> vector<64x128xf32>
    %15 = arith.addf %13, %14 : vector<64x128xf32>
    %c0_7 = arith.constant 0 : index
    %c0_8 = arith.constant 0 : index
    %16 = vector.load %arg9[%c0_7, %c0_8] : memref<64x128xf32, #tpu.memory_space<vmem>>, vector<64x128xf32>
    tpu.vector_store %arg9[%c0_7, %c0_8], %15 {strides = array<i32>} : memref<64x128xf32, #tpu.memory_space<vmem>>, vector<64x128xf32>,
    %c1_i32 = arith.constant 1 : i32
    %17 = arith.cmpi eq, %arg1, %c1_i32 : i32
    %18 = arith.extui %17 : i1 to i32
    %c0_i32_9 = arith.constant 0 : i32
    %19 = arith.cmpi ne, %18, %c0_i32_9 : i32
    scf.if %19 {
      %c0_10 = arith.constant 0 : index
      %c0_11 = arith.constant 0 : index
      %20 = vector.load %arg9[%c0_10, %c0_11] : memref<64x128xf32, #tpu.memory_space<vmem>>, vector<64x128xf32>
      %c0_12 = arith.constant 0 : index
      %c0_13 = arith.constant 0 : index
      %21 = vector.load %arg5[%c0_12, %c0_13] : memref<1x128xf32, #tpu.memory_space<vmem>>, vector<1x128xf32>
      %22 = vector.broadcast %21 : vector<1x128xf32> to vector<64x128xf32>
      %23 = arith.addf %20, %22 : vector<64x128xf32>
      %24 = math.tanh %23 : vector<64x128xf32>
      %25 = vector.shape_cast %24 : vector<64x128xf32> to vector<8x8x128xf32>
      %c0_14 = arith.constant 0 : index
      %c0_15 = arith.constant 0 : index
      %26 = vector.load %arg3[%c0_14, %c0_15] : memref<8x8xf32, #tpu.memory_space<vmem>>, vector<8x8xf32>
      %27 = vector.shape_cast %26 : vector<8x8xf32> to vector<8x8x1xf32>
      %28 = vector.broadcast %27 : vector<8x8x1xf32> to vector<8x8x128xf32>
      %29 = arith.mulf %25, %28 : vector<8x8x128xf32>
      %cst_16 = arith.constant dense<0.000000e+00> : vector<8x128xf32>
      %30 = vector.multi_reduction <add>, %29, %cst_16 [1] : vector<8x8x128xf32> to vector<8x128xf32>
      %c0_17 = arith.constant 0 : index
      %c0_18 = arith.constant 0 : index
      %31 = vector.load %arg6[%c0_17, %c0_18] : memref<128x128xf32, #tpu.memory_space<vmem>>, vector<128x128xf32>
      %cst_19 = arith.constant dense<0.000000e+00> : vector<8x128xf32>
      %32 = tpu.matmul %30, %31, %cst_19 {dimension_numbers = #tpu.dot_dimension_numbers<[1], [0], [0], [1], [0, 0, 1, 1], [], []>} : vector<8x128xf32>, vector<128x128xf32>, vector<8x128xf32> -> vector<8x128xf32>
      %c0_20 = arith.constant 0 : index
      %c0_21 = arith.constant 0 : index
      %33 = vector.load %arg7[%c0_20, %c0_21] : memref<1x128xf32, #tpu.memory_space<vmem>>, vector<1x128xf32>
      %34 = vector.broadcast %33 : vector<1x128xf32> to vector<8x128xf32>
      %35 = arith.addf %32, %34 : vector<8x128xf32>
      %c0_22 = arith.constant 0 : index
      %c0_23 = arith.constant 0 : index
      %36 = vector.load %arg8[%c0_22, %c0_23] : memref<8x128xf32, #tpu.memory_space<vmem>>, vector<8x128xf32>
      tpu.vector_store %arg8[%c0_22, %c0_23], %35 {strides = array<i32>} : memref<8x128xf32, #tpu.memory_space<vmem>>, vector<8x128xf32>,
    } else {
    }
    return
  }
  func.func @transform_0(%arg0: i32, %arg1: i32) -> (i32, i32, i32) {
    %c0_i32 = arith.constant 0 : i32
    %c0_i32_0 = arith.constant 0 : i32
    return %arg1, %arg0, %c0_i32 : i32, i32, i32
  }
  func.func @transform_1(%arg0: i32, %arg1: i32) -> (i32, i32) {
    %c0_i32 = arith.constant 0 : i32
    %c0_i32_0 = arith.constant 0 : i32
    return %arg0, %c0_i32 : i32, i32
  }
  func.func @transform_2(%arg0: i32, %arg1: i32) -> (i32, i32, i32) {
    %c0_i32 = arith.constant 0 : i32
    %c0_i32_0 = arith.constant 0 : i32
    %c0_i32_1 = arith.constant 0 : i32
    %c0_i32_2 = arith.constant 0 : i32
    return %c0_i32, %c0_i32_0, %c0_i32_1 : i32, i32, i32
  }
  func.func @transform_3(%arg0: i32, %arg1: i32) -> (i32, i32) {
    %c0_i32 = arith.constant 0 : i32
    %c0_i32_0 = arith.constant 0 : i32
    %c0_i32_1 = arith.constant 0 : i32
    return %c0_i32, %c0_i32_0 : i32, i32
  }
  func.func @transform_4(%arg0: i32, %arg1: i32) -> (i32, i32) {
    %c0_i32 = arith.constant 0 : i32
    %c0_i32_0 = arith.constant 0 : i32
    %c0_i32_1 = arith.constant 0 : i32
    return %c0_i32, %c0_i32_0 : i32, i32
  }
  func.func @transform_5(%arg0: i32, %arg1: i32) -> (i32, i32) {
    %c0_i32 = arith.constant 0 : i32
    %c0_i32_0 = arith.constant 0 : i32
    %c0_i32_1 = arith.constant 0 : i32
    return %c0_i32, %c0_i32_0 : i32, i32
  }
  func.func @transform_6(%arg0: i32, %arg1: i32) -> (i32, i32) {
    %c0_i32 = arith.constant 0 : i32
    %c0_i32_0 = arith.constant 0 : i32
    return %arg0, %c0_i32 : i32, i32
  }
}

module attributes {stable_mosaic.version = 11 : i64} {
  func.func @_qfc_kernel(%arg0: i32, %arg1: i32, %arg2: memref<1x64x1xi32, #tpu.memory_space<vmem>>, %arg3: memref<8x8xf32, #tpu.memory_space<vmem>>, %arg4: memref<2x24x128xf32, #tpu.memory_space<vmem>>, %arg5: memref<1x128xf32, #tpu.memory_space<vmem>>, %arg6: memref<128x128xf32, #tpu.memory_space<vmem>>, %arg7: memref<1x128xf32, #tpu.memory_space<vmem>>, %arg8: memref<8x128xf32, #tpu.memory_space<vmem>>, %arg9: memref<64x128xf32, #tpu.memory_space<vmem>>) attributes {dimension_semantics = [#tpu.dimension_semantics<parallel>, #tpu.dimension_semantics<arbitrary>], iteration_bounds = array<i64: 2, 2>, scalar_prefetch = 0 : i64, scratch_operands = 1 : i64, tpu.core_type = #tpu.core_type<tc>, window_params = [{transform_indices = @transform_0, window_bounds = array<i64: 1, 64, 1>}, {transform_indices = @transform_1, window_bounds = array<i64: 8, 8>}, {pipeline_mode = #tpu.pipeline_mode<synchronous>, transform_indices = @transform_2, window_bounds = array<i64: 2, 24, 128>}, {pipeline_mode = #tpu.pipeline_mode<synchronous>, transform_indices = @transform_3, window_bounds = array<i64: 1, 128>}, {pipeline_mode = #tpu.pipeline_mode<synchronous>, transform_indices = @transform_4, window_bounds = array<i64: 128, 128>}, {pipeline_mode = #tpu.pipeline_mode<synchronous>, transform_indices = @transform_5, window_bounds = array<i64: 1, 128>}, {transform_indices = @transform_6, window_bounds = array<i64: 8, 128>}]} {
    %c0_i32 = arith.constant 0 : i32
    %0 = arith.cmpi eq, %arg1, %c0_i32 : i32
    %1 = arith.extui %0 : i1 to i32
    %c0_i32_0 = arith.constant 0 : i32
    %2 = arith.cmpi ne, %1, %c0_i32_0 : i32
    scf.if %2 {
      %cst_10 = arith.constant 0.000000e+00 : f32
      %20 = vector.broadcast %cst_10 : f32 to vector<64x128xf32>
      %c0_11 = arith.constant 0 : index
      %c0_12 = arith.constant 0 : index
      %21 = vector.load %arg9[%c0_11, %c0_12] : memref<64x128xf32, #tpu.memory_space<vmem>>, vector<64x128xf32>
      tpu.vector_store %arg9[%c0_11, %c0_12], %20 {strides = array<i32>} : memref<64x128xf32, #tpu.memory_space<vmem>>, vector<64x128xf32>,
    } else {
    }
    %c0 = arith.constant 0 : index
    %c0_1 = arith.constant 0 : index
    %c0_2 = arith.constant 0 : index
    %3 = vector.load %arg2[%c0, %c0_1, %c0_2] : memref<1x64x1xi32, #tpu.memory_space<vmem>>, vector<1x64x1xi32>
    %4 = vector.shape_cast %3 : vector<1x64x1xi32> to vector<64x1xi32>
    %5 = tpu.iota {dimensions = array<i32: 1>} : vector<64x24xi32>
    %6 = vector.broadcast %4 : vector<64x1xi32> to vector<64x24xi32>
    %7 = arith.cmpi eq, %6, %5 : vector<64x24xi32>
    %8 = arith.extui %7 : vector<64x24xi1> to vector<64x24xi32>
    %9 = arith.sitofp %8 : vector<64x24xi32> to vector<64x24xf32>
    %10 = arith.index_cast %arg1 : i32 to index
    %c0_3 = arith.constant 0 : index
    %c0_4 = arith.constant 0 : index
    %11 = vector.load %arg4[%10, %c0_3, %c0_4] : memref<2x24x128xf32, #tpu.memory_space<vmem>>, vector<1x24x128xf32>
    %12 = vector.shape_cast %11 : vector<1x24x128xf32> to vector<24x128xf32>
    %c0_5 = arith.constant 0 : index
    %c0_6 = arith.constant 0 : index
    %13 = vector.load %arg9[%c0_5, %c0_6] : memref<64x128xf32, #tpu.memory_space<vmem>>, vector<64x128xf32>
    %cst = arith.constant dense<0.000000e+00> : vector<64x128xf32>
    %14 = tpu.matmul %9, %12, %cst {dimension_numbers = #tpu.dot_dimension_numbers<[1], [0], [0], [1], [0, 0, 1, 1], [], []>} : vector<64x24xf32>, vector<24x128xf32>, vector<64x128xf32> -> vector<64x128xf32>
    %15 = arith.addf %13, %14 : vector<64x128xf32>
    %c0_7 = arith.constant 0 : index
    %c0_8 = arith.constant 0 : index
    %16 = vector.load %arg9[%c0_7, %c0_8] : memref<64x128xf32, #tpu.memory_space<vmem>>, vector<64x128xf32>
    tpu.vector_store %arg9[%c0_7, %c0_8], %15 {strides = array<i32>} : memref<64x128xf32, #tpu.memory_space<vmem>>, vector<64x128xf32>,
    %c1_i32 = arith.constant 1 : i32
    %17 = arith.cmpi eq, %arg1, %c1_i32 : i32
    %18 = arith.extui %17 : i1 to i32
    %c0_i32_9 = arith.constant 0 : i32
    %19 = arith.cmpi ne, %18, %c0_i32_9 : i32
    scf.if %19 {
      %c0_10 = arith.constant 0 : index
      %c0_11 = arith.constant 0 : index
      %20 = vector.load %arg9[%c0_10, %c0_11] : memref<64x128xf32, #tpu.memory_space<vmem>>, vector<64x128xf32>
      %c0_12 = arith.constant 0 : index
      %c0_13 = arith.constant 0 : index
      %21 = vector.load %arg5[%c0_12, %c0_13] : memref<1x128xf32, #tpu.memory_space<vmem>>, vector<1x128xf32>
      %22 = vector.broadcast %21 : vector<1x128xf32> to vector<64x128xf32>
      %23 = arith.addf %20, %22 : vector<64x128xf32>
      %24 = math.tanh %23 : vector<64x128xf32>
      %25 = vector.shape_cast %24 : vector<64x128xf32> to vector<8x8x128xf32>
      %c0_14 = arith.constant 0 : index
      %c0_15 = arith.constant 0 : index
      %26 = vector.load %arg3[%c0_14, %c0_15] : memref<8x8xf32, #tpu.memory_space<vmem>>, vector<8x8xf32>
      %27 = vector.shape_cast %26 : vector<8x8xf32> to vector<8x8x1xf32>
      %28 = vector.broadcast %27 : vector<8x8x1xf32> to vector<8x8x128xf32>
      %29 = arith.mulf %25, %28 : vector<8x8x128xf32>
      %cst_16 = arith.constant dense<0.000000e+00> : vector<8x128xf32>
      %30 = vector.multi_reduction <add>, %29, %cst_16 [1] : vector<8x8x128xf32> to vector<8x128xf32>
      %c0_17 = arith.constant 0 : index
      %c0_18 = arith.constant 0 : index
      %31 = vector.load %arg6[%c0_17, %c0_18] : memref<128x128xf32, #tpu.memory_space<vmem>>, vector<128x128xf32>
      %cst_19 = arith.constant dense<0.000000e+00> : vector<8x128xf32>
      %32 = tpu.matmul %30, %31, %cst_19 {dimension_numbers = #tpu.dot_dimension_numbers<[1], [0], [0], [1], [0, 0, 1, 1], [], []>} : vector<8x128xf32>, vector<128x128xf32>, vector<8x128xf32> -> vector<8x128xf32>
      %c0_20 = arith.constant 0 : index
      %c0_21 = arith.constant 0 : index
      %33 = vector.load %arg7[%c0_20, %c0_21] : memref<1x128xf32, #tpu.memory_space<vmem>>, vector<1x128xf32>
      %34 = vector.broadcast %33 : vector<1x128xf32> to vector<8x128xf32>
      %35 = arith.addf %32, %34 : vector<8x128xf32>
      %c0_22 = arith.constant 0 : index
      %c0_23 = arith.constant 0 : index
      %36 = vector.load %arg8[%c0_22, %c0_23] : memref<8x128xf32, #tpu.memory_space<vmem>>, vector<8x128xf32>
      tpu.vector_store %arg8[%c0_22, %c0_23], %35 {strides = array<i32>} : memref<8x128xf32, #tpu.memory_space<vmem>>, vector<8x128xf32>,
    } else {
    }
    return
  }
  func.func @transform_0(%arg0: i32, %arg1: i32) -> (i32, i32, i32) {
    %c0_i32 = arith.constant 0 : i32
    %c0_i32_0 = arith.constant 0 : i32
    return %arg1, %arg0, %c0_i32 : i32, i32, i32
  }
  func.func @transform_1(%arg0: i32, %arg1: i32) -> (i32, i32) {
    %c0_i32 = arith.constant 0 : i32
    %c0_i32_0 = arith.constant 0 : i32
    return %arg0, %c0_i32 : i32, i32
  }
  func.func @transform_2(%arg0: i32, %arg1: i32) -> (i32, i32, i32) {
    %c0_i32 = arith.constant 0 : i32
    %c0_i32_0 = arith.constant 0 : i32
    %c0_i32_1 = arith.constant 0 : i32
    %c0_i32_2 = arith.constant 0 : i32
    return %c0_i32, %c0_i32_0, %c0_i32_1 : i32, i32, i32
  }
  func.func @transform_3(%arg0: i32, %arg1: i32) -> (i32, i32) {
    %c0_i32 = arith.constant 0 : i32
    %c0_i32_0 = arith.constant 0 : i32
    %c0_i32_1 = arith.constant 0 : i32
    return %c0_i32, %c0_i32_0 : i32, i32
  }
  func.func @transform_4(%arg0: i32, %arg1: i32) -> (i32, i32) {
    %c0_i32 = arith.constant 0 : i32
    %c0_i32_0 = arith.constant 0 : i32
    %c0_i32_1 = arith.constant 0 : i32
    return %c0_i32, %c0_i32_0 : i32, i32
  }
  func.func @transform_5(%arg0: i32, %arg1: i32) -> (i32, i32) {
    %c0_i32 = arith.constant 0 : i32
    %c0_i32_0 = arith.constant 0 : i32
    %c0_i32_1 = arith.constant 0 : i32
    return %c0_i32, %c0_i32_0 : i32, i32
  }
  func.func @transform_6(%arg0: i32, %arg1: i32) -> (i32, i32) {
    %c0_i32 = arith.constant 0 : i32
    %c0_i32_0 = arith.constant 0 : i32
    return %arg0, %c0_i32 : i32, i32
  }
}

</mosaic_0001>

<llo_original>
// kernel: _forward_impl.1
$region0: #{_forward_impl.1}
  #allocation0 [shape = 'u32[]', space=smem, size = 0x4, offset = 0x4, fixed_abs, tag = 'smem constant byte address 0x4 - core index']
  #allocation1 [shape = 'u32[144,128]{1,0:T(1,128)}', space=vmem, size = 0x12000, scoped, tag = 'internal scratch']
  #allocation2 [shape = 'f32[64,128]{1,0:T(8,128)}', space=vmem, size = 0x8000, scoped, tag = 'scratch operand']
  %s0 = inlined_call_operand.vmem [shape: s32[2,128,1], index: 0, kind: input, shape index: {}]
  %s1 = inlined_call_operand.vmem [shape: f32[16,8], index: 1, kind: input, shape index: {}]
  %s2 = inlined_call_operand.vmem [shape: f32[2,24,128], index: 2, kind: input, shape index: {}]
  %s3 = inlined_call_operand.vmem [shape: f32[1,128], index: 3, kind: input, shape index: {}]
  %s4 = inlined_call_operand.vmem [shape: f32[128,128], index: 4, kind: input, shape index: {}]
  %s5 = inlined_call_operand.vmem [shape: f32[1,128], index: 5, kind: input, shape index: {}]
  %s6 = inlined_call_operand.vmem [shape: f32[16,128], index: 6, kind: output, shape index: {}]
  %s7 = sld [smem:[#allocation0]]
  $region65: #{_forward_impl.1} parent=0
    _
  %s9 = ssub.s32 1, %s7
  %s10 = scalar_select 0, %s9, %s7
  loop: start=0, step=1, limit=6
  $region2: #{_forward_impl.1} parent=0 // loop_pre_header
    _
  $region3: #{_forward_impl.1} parent=0 // loop_header
    %s12 = sphi 0, %s16
    %p13 = scmp.ge.s32.totalorder %s12, 6
    %s19 = sphi 0, %s31
    %s20 = sphi 0, %s27
    %s21 = sphi 0, %s19
    %s22 = sphi 0, %s20
    %s23 = sphi 0, %s21
    %s24 = sphi 0, %s22
    %s36 = sphi 0, %s38
    %s39 = sphi 0, %s36
    %s40 = sphi 0, %s39
    %s56 = sphi 0, %s40
    %s62 = sphi 0, %s64
    %s65 = sphi 0, %s62
    %s66 = sphi 0, %s65
    %s82 = sphi 0, %s66
    %s86 = sphi 0, %s86
    %s88 = sphi 0, %s86
    %s89 = sphi 0, %s88
    %s103 = sphi 0, %s89
    %s107 = sphi 0, %s107
    %s109 = sphi 0, %s107
    %s110 = sphi 0, %s109
    %s124 = sphi 0, %s110
    %s128 = sphi 0, %s128
    %s130 = sphi 0, %s128
    %s131 = sphi 0, %s130
    %s145 = sphi 0, %s131
    %s149 = sphi 0, %s149
    %s151 = sphi 0, %s149
    %s152 = sphi 0, %s151
    %s166 = sphi 0, %s152
    %s172 = sphi 0, %s174
    %s175 = sphi 0, %s172
    %s176 = sphi 0, %s175
    %s192 = sphi 0, %s176
  $region4: #{_forward_impl.1} parent=0 // loop_header_branch
    %15 = sbr.rel (%p13) target = $region8
  $region5: #{_forward_impl.1} parent=0 // loop_body
    %s17 = ssub.s32 %s12, 1
    %s18 = ssub.s32 %s12, 2
    %s25 = sadd.s32 1, %s20
    %p26 = scmp.ge.s32.totalorder %s25, 2
    %s27 = scalar_select %p26, 0, %s25
    %s28 = sadd.s32 1, %s19
    %s29 = scalar_select %p26, %s28, %s19
    %p30 = scmp.ge.s32.totalorder %s29, 2
    %s31 = scalar_select %p30, 0, %s29
    %s32 = ssub.s32 %s20, %s27
    %s33 = ssub.s32 %s19, %s31
    %s34 = sor.u32 %s32, %s33
    %p35 = scmp.eq.s32.totalorder %s34, 0
    %s37 = sadd.s32 %s36, 1
    %s38 = scalar_select %p35, %s36, %s37
    %p41 = pneg %p35
    %p42 = scmp.eq.s32.totalorder %s12, 3
    %p43 = por %p41, %p42
    %p44 = scmp.ne.s32.totalorder %s36, %s39
    %p45 = scmp.eq.s32.totalorder %s12, 0
    %p46 = por %p44, %p45
    %p47 = scmp.ne.s32.totalorder %s36, %s39
    %p48 = scmp.eq.s32.totalorder %s17, 3
    %p49 = por %p47, %p48
    %p50 = scmp.ne.s32.totalorder %s39, %s40
    %p51 = scmp.eq.s32.totalorder %s17, 0
    %p52 = por %p50, %p51
    %p53 = scmp.ne.s32.totalorder %s39, %s40
    %p54 = scmp.eq.s32.totalorder %s18, 3
    %p55 = por %p53, %p54
    %p57 = scmp.ne.s32.totalorder %s40, %s56
    %p58 = scmp.eq.s32.totalorder %s18, 0
    %p59 = por %p57, %p58
    %s60 = ssub.s32 %s19, %s31
    %p61 = scmp.eq.s32.totalorder %s60, 0
    %s63 = sadd.s32 %s62, 1
    %s64 = scalar_select %p61, %s62, %s63
    %p67 = pneg %p61
    %p68 = scmp.eq.s32.totalorder %s12, 3
    %p69 = por %p67, %p68
    %p70 = scmp.ne.s32.totalorder %s62, %s65
    %p71 = scmp.eq.s32.totalorder %s12, 0
    %p72 = por %p70, %p71
    %p73 = scmp.ne.s32.totalorder %s62, %s65
    %p74 = scmp.eq.s32.totalorder %s17, 3
    %p75 = por %p73, %p74
    %p76 = scmp.ne.s32.totalorder %s65, %s66
    %p77 = scmp.eq.s32.totalorder %s17, 0
    %p78 = por %p76, %p77
    %p79 = scmp.ne.s32.totalorder %s65, %s66
    %p80 = scmp.eq.s32.totalorder %s18, 3
    %p81 = por %p79, %p80
    %p83 = scmp.ne.s32.totalorder %s66, %s82
    %p84 = scmp.eq.s32.totalorder %s18, 0
    %p85 = por %p83, %p84
    %s87 = sadd.s32 %s86, 1
    %p90 = scmp.eq.s32.totalorder %s12, 3
    %p91 = scmp.ne.s32.totalorder %s86, %s88
    %p92 = scmp.eq.s32.totalorder %s12, 0
    %p93 = por %p91, %p92
    %p94 = scmp.ne.s32.totalorder %s86, %s88
    %p95 = scmp.eq.s32.totalorder %s17, 3
    %p96 = por %p94, %p95
    %p97 = scmp.ne.s32.totalorder %s88, %s89
    %p98 = scmp.eq.s32.totalorder %s17, 0
    %p99 = por %p97, %p98
    %p100 = scmp.ne.s32.totalorder %s88, %s89
    %p101 = scmp.eq.s32.totalorder %s18, 3
    %p102 = por %p100, %p101
    %p104 = scmp.ne.s32.totalorder %s89, %s103
    %p105 = scmp.eq.s32.totalorder %s18, 0
    %p106 = por %p104, %p105
    %s108 = sadd.s32 %s107, 1
    %p111 = scmp.eq.s32.totalorder %s12, 3
    %p112 = scmp.ne.s32.totalorder %s107, %s109
    %p113 = scmp.eq.s32.totalorder %s12, 0
    %p114 = por %p112, %p113
    %p115 = scmp.ne.s32.totalorder %s107, %s109
    %p116 = scmp.eq.s32.totalorder %s17, 3
    %p117 = por %p115, %p116
    %p118 = scmp.ne.s32.totalorder %s109, %s110
    %p119 = scmp.eq.s32.totalorder %s17, 0
    %p120 = por %p118, %p119
    %p121 = scmp.ne.s32.totalorder %s109, %s110
    %p122 = scmp.eq.s32.totalorder %s18, 3
    %p123 = por %p121, %p122
    %p125 = scmp.ne.s32.totalorder %s110, %s124
    %p126 = scmp.eq.s32.totalorder %s18, 0
    %p127 = por %p125, %p126
    %s129 = sadd.s32 %s128, 1
    %p132 = scmp.eq.s32.totalorder %s12, 3
    %p133 = scmp.ne.s32.totalorder %s128, %s130
    %p134 = scmp.eq.s32.totalorder %s12, 0
    %p135 = por %p133, %p134
    %p136 = scmp.ne.s32.totalorder %s128, %s130
    %p137 = scmp.eq.s32.totalorder %s17, 3
    %p138 = por %p136, %p137
    %p139 = scmp.ne.s32.totalorder %s130, %s131
    %p140 = scmp.eq.s32.totalorder %s17, 0
    %p141 = por %p139, %p140
    %p142 = scmp.ne.s32.totalorder %s130, %s131
    %p143 = scmp.eq.s32.totalorder %s18, 3
    %p144 = por %p142, %p143
    %p146 = scmp.ne.s32.totalorder %s131, %s145
    %p147 = scmp.eq.s32.totalorder %s18, 0
    %p148 = por %p146, %p147
    %s150 = sadd.s32 %s149, 1
    %p153 = scmp.eq.s32.totalorder %s12, 3
    %p154 = scmp.ne.s32.totalorder %s149, %s151
    %p155 = scmp.eq.s32.totalorder %s12, 0
    %p156 = por %p154, %p155
    %p157 = scmp.ne.s32.totalorder %s149, %s151
    %p158 = scmp.eq.s32.totalorder %s17, 3
    %p159 = por %p157, %p158
    %p160 = scmp.ne.s32.totalorder %s151, %s152
    %p161 = scmp.eq.s32.totalorder %s17, 0
    %p162 = por %p160, %p161
    %p163 = scmp.ne.s32.totalorder %s151, %s152
    %p164 = scmp.eq.s32.totalorder %s18, 3
    %p165 = por %p163, %p164
    %p167 = scmp.ne.s32.totalorder %s152, %s166
    %p168 = scmp.eq.s32.totalorder %s18, 0
    %p169 = por %p167, %p168
    %s170 = ssub.s32 %s19, %s31
    %p171 = scmp.eq.s32.totalorder %s170, 0
    %s173 = sadd.s32 %s172, 1
    %s174 = scalar_select %p171, %s172, %s173
    %p177 = pneg %p171
    %p178 = scmp.eq.s32.totalorder %s12, 3
    %p179 = por %p177, %p178
    %p180 = scmp.ne.s32.totalorder %s172, %s175
    %p181 = scmp.eq.s32.totalorder %s12, 0
    %p182 = por %p180, %p181
    %p183 = scmp.ne.s32.totalorder %s172, %s175
    %p184 = scmp.eq.s32.totalorder %s17, 3
    %p185 = por %p183, %p184
    %p186 = scmp.ne.s32.totalorder %s175, %s176
    %p187 = scmp.eq.s32.totalorder %s17, 0
    %p188 = por %p186, %p187
    %p189 = scmp.ne.s32.totalorder %s175, %s176
    %p190 = scmp.eq.s32.totalorder %s18, 3
    %p191 = por %p189, %p190
    %p193 = scmp.ne.s32.totalorder %s176, %s192
    %p194 = scmp.eq.s32.totalorder %s18, 0
    %p195 = por %p193, %p194
    %p196 = scmp.le.s32.totalorder 1, %s12
    %p197 = scmp.lt.s32.totalorder %s12, 5
    %p198 = pnand %p196, %p197
    %p199 = pneg %p198
    // Predicated region
    $region9: #{_forward_impl.1} parent=5 // pred_check
      _
    $region10: #{_forward_impl.1} parent=5 // pred_check_branch
      %201 = sbr.rel (%p198) target = $region12
    $region11: #{_forward_impl.1} parent=5 // pred_region
      %s202 = ssub.s32 %s12, 1
      // Predicated region
      $region13: #{_forward_impl.1} parent=11 // pred_check
        %p203 = pneg %p99
      $region14: #{_forward_impl.1} parent=11 // pred_check_branch
        %205 = sbr.rel (%p203) target = $region16
      $region15: #{_forward_impl.1} parent=11 // pred_region
        _
      $region16: #{_forward_impl.1} parent=11 // pred_fallthru
        _
      // Predicated region
      $region17: #{_forward_impl.1} parent=11 // pred_check
        %p206 = pneg %p120
      $region18: #{_forward_impl.1} parent=11 // pred_check_branch
        %208 = sbr.rel (%p206) target = $region20
      $region19: #{_forward_impl.1} parent=11 // pred_region
        _
      $region20: #{_forward_impl.1} parent=11 // pred_fallthru
        _
      // Predicated region
      $region21: #{_forward_impl.1} parent=11 // pred_check
        %p209 = pneg %p141
      $region22: #{_forward_impl.1} parent=11 // pred_check_branch
        %211 = sbr.rel (%p209) target = $region24
      $region23: #{_forward_impl.1} parent=11 // pred_region
        _
      $region24: #{_forward_impl.1} parent=11 // pred_fallthru
        _
      // Predicated region
      $region25: #{_forward_impl.1} parent=11 // pred_check
        %p212 = pneg %p162
      $region26: #{_forward_impl.1} parent=11 // pred_check_branch
        %214 = sbr.rel (%p212) target = $region28
      $region27: #{_forward_impl.1} parent=11 // pred_region
        _
      $region28: #{_forward_impl.1} parent=11 // pred_fallthru
        _
    $region12: #{_forward_impl.1} parent=5 // pred_fallthru
      _
    %p215 = scmp.lt.s32.totalorder %s12, 4
    // Predicated region
    $region29: #{_forward_impl.1} parent=5 // pred_check
      %p216 = pneg %p215
    $region30: #{_forward_impl.1} parent=5 // pred_check_branch
      %218 = sbr.rel (%p216) target = $region32
    $region31: #{_forward_impl.1} parent=5 // pred_region
      // Predicated region
      $region33: #{_forward_impl.1} parent=31 // pred_check
        %p219 = pneg %p46
      $region34: #{_forward_impl.1} parent=31 // pred_check_branch
        %221 = sbr.rel (%p219) target = $region36
      $region35: #{_forward_impl.1} parent=31 // pred_region
        %s222 = smul.u32 8, %s19
        %p223 = scmp.lt.s32.totalorder %s20, 1
        %s224 = scalar_select %p223, %s20, 1
        %p225 = scmp.lt.s32.totalorder %s222, 15
        %s226 = scalar_select %p225, %s222, 15
        %s227 = smul.addr %s224, 16
        %s228 = sadd.s32 %s226, %s227
        %s229 = smul.addr %s228, 8
        %s230 = scalar_lea.vmem %s0, %s229
        %s231 = smul.u32 8, %s19
      $region36: #{_forward_impl.1} parent=31 // pred_fallthru
        _
      // Predicated region
      $region37: #{_forward_impl.1} parent=31 // pred_check
        %p232 = pneg %p72
      $region38: #{_forward_impl.1} parent=31 // pred_check_branch
        %234 = sbr.rel (%p232) target = $region40
      $region39: #{_forward_impl.1} parent=31 // pred_region
        %p235 = scmp.lt.s32.totalorder %s19, 1
        %s236 = scalar_select %p235, %s19, 1
        %s237 = smul.addr %s236, 8
        %s238 = scalar_lea.vmem %s1, %s237
      $region40: #{_forward_impl.1} parent=31 // pred_fallthru
        _
    $region32: #{_forward_impl.1} parent=5 // pred_fallthru
      _
    %p239 = scmp.le.s32.totalorder 1, %s12
    %p240 = scmp.lt.s32.totalorder %s12, 5
    %p241 = pnand %p239, %p240
    %p242 = pneg %p241
    // Predicated region
    $region41: #{_forward_impl.1} parent=5 // pred_check
      _
    $region42: #{_forward_impl.1} parent=5 // pred_check_branch
      %244 = sbr.rel (%p241) target = $region44
    $region43: #{_forward_impl.1} parent=5 // pred_region
      %s245 = ssub.s32 %s12, 1
      %s246 = smul.u32 8, %s21
      %p247 = scmp.lt.s32.totalorder %s22, 1
      %s248 = scalar_select %p247, %s22, 1
      %p249 = scmp.lt.s32.totalorder %s246, 15
      %s250 = scalar_select %p249, %s246, 15
      %s251 = smul.addr %s248, 16
      %s252 = sadd.s32 %s250, %s251
      %s253 = smul.addr %s252, 8
      %s254 = scalar_lea.vmem %s0, %s253
      %p255 = pneg %p52
      %p256 = pneg %p49
      %p257 = scmp.lt.s32.totalorder %s21, 1
      %s258 = scalar_select %p257, %s21, 1
      %s259 = smul.addr %s258, 8
      %s260 = scalar_lea.vmem %s1, %s259
      %p261 = pneg %p78
      %p262 = pneg %p75
      %p263 = pneg %p99
      %p264 = pneg %p96
      %p265 = pneg %p120
      %p266 = pneg %p117
      %p267 = pneg %p141
      %p268 = pneg %p138
      %p269 = pneg %p162
      %p270 = pneg %p159
      %p271 = pneg %p188
      %p272 = pneg %p185
      %p273 = scmp.lt.s32.totalorder %s21, 1
      %s274 = scalar_select %p273, %s21, 1
      %s275 = smul.addr %s274, 8
      %s276 = scalar_lea.vmem %s6, %s275
      %s277 = smul.u32 8, %s21
      %p278 = scmp.lt.s32.totalorder %s22, 1
      %s279 = scalar_select %p278, %s22, 1
      %p280 = scmp.lt.s32.totalorder %s277, 15
      %s281 = scalar_select %p280, %s277, 15
      %s282 = smul.addr %s279, 16
      %s283 = sadd.s32 %s281, %s282
      %s284 = smul.addr %s283, 8
      %s285 = scalar_lea.vmem %s0, %s284
      %s286 = smul.u32 8, %s21
      %p287 = scmp.lt.s32.totalorder %s21, 1
      %s288 = scalar_select %p287, %s21, 1
      %s289 = smul.addr %s288, 8
      %s290 = scalar_lea.vmem %s1, %s289
      %p291 = scmp.lt.s32.totalorder %s21, 1
      %s292 = scalar_select %p291, %s21, 1
      %s293 = smul.addr %s292, 8
      %s294 = scalar_lea.vmem %s6, %s293
      %p295 = scmp.eq.s32.totalorder %s22, 0
      // Predicated region
      $region45: #{_forward_impl.1} parent=43 // pred_check
        %p296 = pneg %p295
      $region46: #{_forward_impl.1} parent=43 // pred_check_branch
        %298 = sbr.rel (%p296) target = $region48
      $region47: #{_forward_impl.1} parent=43 // pred_region
        %299 = vst [vmem:[#allocation2] sm:$0xff] 0.0
        %300 = vst [vmem:[#allocation2 + $0x8] sm:$0xff] 0.0
        %301 = vst [vmem:[#allocation2 + $0x10] sm:$0xff] 0.0
        %302 = vst [vmem:[#allocation2 + $0x18] sm:$0xff] 0.0
        %303 = vst [vmem:[#allocation2 + $0x20] sm:$0xff] 0.0
        %304 = vst [vmem:[#allocation2 + $0x28] sm:$0xff] 0.0
        %305 = vst [vmem:[#allocation2 + $0x30] sm:$0xff] 0.0
        %306 = vst [vmem:[#allocation2 + $0x38] sm:$0xff] 0.0
      $region48: #{_forward_impl.1} parent=43 // pred_fallthru
        _
      %v307 = vld [vmem:[%s285] sm:$0xff]
      %v308 = vld [vmem:[%s285 + $0x8] sm:$0xff]
      %v309 = vld [vmem:[%s285 + $0x10] sm:$0xff]
      %v310 = vld [vmem:[%s285 + $0x18] sm:$0xff]
      %v311 = vld [vmem:[%s285 + $0x20] sm:$0xff]
      %v312 = vld [vmem:[%s285 + $0x28] sm:$0xff]
      %v313 = vld [vmem:[%s285 + $0x30] sm:$0xff]
      %v314 = vld [vmem:[%s285 + $0x38] sm:$0xff]
      %v315 = vlaneseq
      %v316 = vand.u32 %v315, 127
      %317 = vset.pattern.permute.xlu0 0
      %318 = vperm.xlu0 %317, %v307
      %v319 = vpop.permute.xlu0 %318
      %320 = vset.pattern.permute.xlu0 0
      %321 = vperm.xlu0 %320, %v308
      %v322 = vpop.permute.xlu0 %321
      %323 = vset.pattern.permute.xlu0 0
      %324 = vperm.xlu0 %323, %v309
      %v325 = vpop.permute.xlu0 %324
      %326 = vset.pattern.permute.xlu0 0
      %327 = vperm.xlu0 %326, %v310
      %v328 = vpop.permute.xlu0 %327
      %329 = vset.pattern.permute.xlu0 0
      %330 = vperm.xlu0 %329, %v311
      %v331 = vpop.permute.xlu0 %330
      %332 = vset.pattern.permute.xlu0 0
      %333 = vperm.xlu0 %332, %v312
      %v334 = vpop.permute.xlu0 %333
      %335 = vset.pattern.permute.xlu0 0
      %336 = vperm.xlu0 %335, %v313
      %v337 = vpop.permute.xlu0 %336
      %338 = vset.pattern.permute.xlu0 0
      %339 = vperm.xlu0 %338, %v314
      %v340 = vpop.permute.xlu0 %339
      %vm341 = vcmp.eq.s32.totalorder %v319, %v316
      %vm342 = vcmp.eq.s32.totalorder %v322, %v316
      %vm343 = vcmp.eq.s32.totalorder %v325, %v316
      %vm344 = vcmp.eq.s32.totalorder %v328, %v316
      %vm345 = vcmp.eq.s32.totalorder %v331, %v316
      %vm346 = vcmp.eq.s32.totalorder %v334, %v316
      %vm347 = vcmp.eq.s32.totalorder %v337, %v316
      %vm348 = vcmp.eq.s32.totalorder %v340, %v316
      %v349 = vsel %vm341, 1, 0
      %v350 = vsel %vm342, 1, 0
      %v351 = vsel %vm343, 1, 0
      %v352 = vsel %vm344, 1, 0
      %v353 = vsel %vm345, 1, 0
      %v354 = vsel %vm346, 1, 0
      %v355 = vsel %vm347, 1, 0
      %v356 = vsel %vm348, 1, 0
      %v357 = vcvt.s32.f32 %v349
      %v358 = vcvt.s32.f32 %v350
      %v359 = vcvt.s32.f32 %v351
      %v360 = vcvt.s32.f32 %v352
      %v361 = vcvt.s32.f32 %v353
      %v362 = vcvt.s32.f32 %v354
      %v363 = vcvt.s32.f32 %v355
      %v364 = vcvt.s32.f32 %v356
      %s365 = smul.u32 %s22, 24
      %s366 = scalar_lea.vmem %s2, %s365
      %v367 = vld [vmem:[%s366] sm:$0xff]
      %v368 = vld [vmem:[%s366 + $0x8] sm:$0xff]
      %v369 = vld [vmem:[%s366 + $0x10] sm:$0xff]
      %v370 = vld [vmem:[#allocation2] sm:$0xff]
      %v371 = vld [vmem:[#allocation2 + $0x8] sm:$0xff]
      %v372 = vld [vmem:[#allocation2 + $0x10] sm:$0xff]
      %v373 = vld [vmem:[#allocation2 + $0x18] sm:$0xff]
      %v374 = vld [vmem:[#allocation2 + $0x20] sm:$0xff]
      %v375 = vld [vmem:[#allocation2 + $0x28] sm:$0xff]
      %v376 = vld [vmem:[#allocation2 + $0x30] sm:$0xff]
      %v377 = vld [vmem:[#allocation2 + $0x38] sm:$0xff]
      %vm378 = vcmask 195584
      %v380 = vsel %vm378, %v357, 0
      %v383 = vsel %vm378, %v358, 0
      %v386 = vsel %vm378, %v359, 0
      %v389 = vsel %vm378, %v360, 0
      %v392 = vsel %vm378, %v361, 0
      %v395 = vsel %vm378, %v362, 0
      %v398 = vsel %vm378, %v363, 0
      %v401 = vsel %vm378, %v364, 0
      %403 = vmatprep.subr.mxu0 0.0
      %404 = vmatpush1.msra.mxu0 0.0
      %405 = vmatprep.subr.mxu0 0.0
      %406 = vmatpush1.msra.mxu0 0.0
      %407 = vmatprep.subr.mxu0 0.0
      %408 = vmatpush1.msra.mxu0 0.0
      %409 = vmatprep.subr.mxu0 0.0
      %410 = vmatpush1.msra.mxu0 0.0
      %411 = vmatprep.subr.mxu0 0.0
      %412 = vmatpush1.msra.mxu0 0.0
      %413 = vmatprep.subr.mxu0 0.0
      %414 = vmatpush1.msra.mxu0 0.0
      %415 = vmatprep.subr.mxu0 0.0
      %416 = vmatpush1.msra.mxu0 0.0
      %417 = vmatprep.subr.mxu0 0.0
      %418 = vmatpush1.msra.mxu0 0.0
      %419 = vmatprep.subr.mxu0 0.0
      %420 = vmatpush1.msra.mxu0 0.0
      %421 = vmatprep.subr.mxu0 0.0
      %422 = vmatpush1.msra.mxu0 0.0
      %423 = vmatprep.subr.mxu0 0.0
      %424 = vmatpush1.msra.mxu0 0.0
      %425 = vmatprep.subr.mxu0 0.0
      %426 = vmatpush1.msra.mxu0 0.0
      %427 = vmatprep.subr.mxu0 0.0
      %428 = vmatpush1.msra.mxu0 0.0
      %429 = vmatprep.subr.mxu0 0.0
      %430 = vmatpush1.msra.mxu0 %v369
      %431 = vmatprep.subr.mxu0 0.0
      %432 = vmatpush1.msra.mxu0 %v368
      %433 = vmatprep.subr.mxu0 0.0
      %434 = vmatpush1.msra.mxu0 %v367
      %435 = vmatprep.subr.mxu0 0.0
      %436 = vmatpush2.msra.mxu0 0.0
      %437 = vmatprep.subr.mxu0 0.0
      %438 = vmatpush2.msra.mxu0 0.0
      %439 = vmatprep.subr.mxu0 0.0
      %440 = vmatpush2.msra.mxu0 0.0
      %441 = vmatprep.subr.mxu0 0.0
      %442 = vmatpush2.msra.mxu0 0.0
      %443 = vmatprep.subr.mxu0 0.0
      %444 = vmatpush2.msra.mxu0 0.0
      %445 = vmatprep.subr.mxu0 0.0
      %446 = vmatpush2.msra.mxu0 0.0
      %447 = vmatprep.subr.mxu0 0.0
      %448 = vmatpush2.msra.mxu0 0.0
      %449 = vmatprep.subr.mxu0 0.0
      %450 = vmatpush2.msra.mxu0 0.0
      %451 = vmatprep.subr.mxu0 0.0
      %452 = vmatpush2.msra.mxu0 0.0
      %453 = vmatprep.subr.mxu0 0.0
      %454 = vmatpush2.msra.mxu0 0.0
      %455 = vmatprep.subr.mxu0 0.0
      %456 = vmatpush2.msra.mxu0 0.0
      %457 = vmatprep.subr.mxu0 0.0
      %458 = vmatpush2.msra.mxu0 0.0
      %459 = vmatprep.subr.mxu0 0.0
      %460 = vmatpush2.msra.mxu0 0.0
      %461 = vmatprep.subr.mxu0 0.0
      %462 = vmatpush2.msra.mxu0 0.0
      %463 = vmatprep.subr.mxu0 0.0
      %464 = vmatpush2.msra.mxu0 0.0
      %465 = vmatprep.subr.mxu0 0.0
      %466 = vmatpush2.msra.mxu0 0.0
      %467 = vmatprep.mubr.f32.mxu0 0.0
      %468 = vmatmul.mubr.f32.gmra.mxu0 %v380
      %v469 = vpop.f32.mrf.mxu0
      %v470 = vadd.f32 0.0, %v469
      %v471 = vpop.f32.mrf.mxu0
      %472 = vmatprep.mubr.f32.mxu0 0.0
      %473 = vmatmul.mubr.f32.gmra.mxu0 %v383
      %v474 = vpop.f32.mrf.mxu0
      %v475 = vadd.f32 0.0, %v474
      %v476 = vpop.f32.mrf.mxu0
      %477 = vmatprep.mubr.f32.mxu0 0.0
      %478 = vmatmul.mubr.f32.gmra.mxu0 %v386
      %v479 = vpop.f32.mrf.mxu0
      %v480 = vadd.f32 0.0, %v479
      %v481 = vpop.f32.mrf.mxu0
      %482 = vmatprep.mubr.f32.mxu0 0.0
      %483 = vmatmul.mubr.f32.gmra.mxu0 %v389
      %v484 = vpop.f32.mrf.mxu0
      %v485 = vadd.f32 0.0, %v484
      %v486 = vpop.f32.mrf.mxu0
      %487 = vmatprep.mubr.f32.mxu0 0.0
      %488 = vmatmul.mubr.f32.gmra.mxu0 %v392
      %v489 = vpop.f32.mrf.mxu0
      %v490 = vadd.f32 0.0, %v489
      %v491 = vpop.f32.mrf.mxu0
      %492 = vmatprep.mubr.f32.mxu0 0.0
      %493 = vmatmul.mubr.f32.gmra.mxu0 %v395
      %v494 = vpop.f32.mrf.mxu0
      %v495 = vadd.f32 0.0, %v494
      %v496 = vpop.f32.mrf.mxu0
      %497 = vmatprep.mubr.f32.mxu0 0.0
      %498 = vmatmul.mubr.f32.gmra.mxu0 %v398
      %v499 = vpop.f32.mrf.mxu0
      %v500 = vadd.f32 0.0, %v499
      %v501 = vpop.f32.mrf.mxu0
      %502 = vmatprep.mubr.f32.mxu0 0.0
      %503 = vmatmul.mubr.f32.gmra.mxu0 %v401
      %v504 = vpop.f32.mrf.mxu0
      %v505 = vadd.f32 0.0, %v504
      %v506 = vpop.f32.mrf.mxu0
      %507 = vdwg.mxu0
      %v508 = vadd.f32 %v370, %v470
      %v509 = vadd.f32 %v371, %v475
      %v510 = vadd.f32 %v372, %v480
      %v511 = vadd.f32 %v373, %v485
      %v512 = vadd.f32 %v374, %v490
      %v513 = vadd.f32 %v375, %v495
      %v514 = vadd.f32 %v376, %v500
      %v515 = vadd.f32 %v377, %v505
      %516 = vst [vmem:[#allocation2] sm:$0xff] %v508
      %517 = vst [vmem:[#allocation2 + $0x8] sm:$0xff] %v509
      %518 = vst [vmem:[#allocation2 + $0x10] sm:$0xff] %v510
      %519 = vst [vmem:[#allocation2 + $0x18] sm:$0xff] %v511
      %520 = vst [vmem:[#allocation2 + $0x20] sm:$0xff] %v512
      %521 = vst [vmem:[#allocation2 + $0x28] sm:$0xff] %v513
      %522 = vst [vmem:[#allocation2 + $0x30] sm:$0xff] %v514
      %523 = vst [vmem:[#allocation2 + $0x38] sm:$0xff] %v515
      %p524 = scmp.eq.s32.totalorder %s22, 1
      // Predicated region
      $region49: #{_forward_impl.1} parent=43 // pred_check
        %p525 = pneg %p524
      $region50: #{_forward_impl.1} parent=43 // pred_check_branch
        %527 = sbr.rel (%p525) target = $region52
      $region51: #{_forward_impl.1} parent=43 // pred_region
        %v528 = vld [vmem:[#allocation2] sm:$0xff]
        %v529 = vld [vmem:[#allocation2 + $0x8] sm:$0xff]
        %v530 = vld [vmem:[#allocation2 + $0x10] sm:$0xff]
        %v531 = vld [vmem:[#allocation2 + $0x18] sm:$0xff]
        %v532 = vld [vmem:[#allocation2 + $0x20] sm:$0xff]
        %v533 = vld [vmem:[#allocation2 + $0x28] sm:$0xff]
        %v534 = vld [vmem:[#allocation2 + $0x30] sm:$0xff]
        %v535 = vld [vmem:[#allocation2 + $0x38] sm:$0xff]
        %v536 = vld [vmem:[%s3] sm:$0x1]
        %v538 = vlaneseq
        %v539 = vshrl.u32 %v538, 7
        %v540 = vsub.s32 0, %v539
        %v541 = vrot.slane %v536, %v540
        %v543 = vadd.f32 %v528, %v541
        %v544 = vadd.f32 %v529, %v541
        %v545 = vadd.f32 %v530, %v541
        %v546 = vadd.f32 %v531, %v541
        %v547 = vadd.f32 %v532, %v541
        %v548 = vadd.f32 %v533, %v541
        %v549 = vadd.f32 %v534, %v541
        %v550 = vadd.f32 %v535, %v541
        %v551 = vtanh.pop %v543
        %v552 = vtanh.pop %v544
        %v553 = vtanh.pop %v545
        %v554 = vtanh.pop %v546
        %v555 = vtanh.pop %v547
        %v556 = vtanh.pop %v548
        %v557 = vtanh.pop %v549
        %v558 = vtanh.pop %v550
        %v559 = vld [vmem:[%s290] sm:$0xff]
        %v560 = vlaneseq
        %v561 = vshrl.u32 %v560, 7
        %v562 = vsub.s32 0, %v561
        %v563 = vrot.slane %v559, %v562
        %565 = vbcast.lane.b32.xlu0 %v563, 256
        %v566 = vpop.permute.xlu0 %565
        %v567 = vlaneseq
        %v568 = vshrl.u32 %v567, 7
        %v569 = vsub.s32 1, %v568
        %v570 = vrot.slane %v559, %v569
        %572 = vbcast.lane.b32.xlu0 %v570, 256
        %v573 = vpop.permute.xlu0 %572
        %v574 = vlaneseq
        %v575 = vshrl.u32 %v574, 7
        %v576 = vsub.s32 2, %v575
        %v577 = vrot.slane %v559, %v576
        %579 = vbcast.lane.b32.xlu0 %v577, 256
        %v580 = vpop.permute.xlu0 %579
        %v581 = vlaneseq
        %v582 = vshrl.u32 %v581, 7
        %v583 = vsub.s32 3, %v582
        %v584 = vrot.slane %v559, %v583
        %586 = vbcast.lane.b32.xlu0 %v584, 256
        %v587 = vpop.permute.xlu0 %586
        %v588 = vlaneseq
        %v589 = vshrl.u32 %v588, 7
        %v590 = vsub.s32 4, %v589
        %v591 = vrot.slane %v559, %v590
        %593 = vbcast.lane.b32.xlu0 %v591, 256
        %v594 = vpop.permute.xlu0 %593
        %v595 = vlaneseq
        %v596 = vshrl.u32 %v595, 7
        %v597 = vsub.s32 5, %v596
        %v598 = vrot.slane %v559, %v597
        %600 = vbcast.lane.b32.xlu0 %v598, 256
        %v601 = vpop.permute.xlu0 %600
        %v602 = vlaneseq
        %v603 = vshrl.u32 %v602, 7
        %v604 = vsub.s32 6, %v603
        %v605 = vrot.slane %v559, %v604
        %607 = vbcast.lane.b32.xlu0 %v605, 256
        %v608 = vpop.permute.xlu0 %607
        %v609 = vlaneseq
        %v610 = vshrl.u32 %v609, 7
        %v611 = vsub.s32 7, %v610
        %v612 = vrot.slane %v559, %v611
        %614 = vbcast.lane.b32.xlu0 %v612, 256
        %v615 = vpop.permute.xlu0 %614
        %v616 = vmul.f32 %v551, %v566
        %v617 = vmul.f32 %v552, %v573
        %v618 = vmul.f32 %v553, %v580
        %v619 = vmul.f32 %v554, %v587
        %v620 = vmul.f32 %v555, %v594
        %v621 = vmul.f32 %v556, %v601
        %v622 = vmul.f32 %v557, %v608
        %v623 = vmul.f32 %v558, %v615
        %v624 = vrot.slane %v616, 4
        %v625 = vadd.f32 %v616, %v624
        %v626 = vrot.slane %v625, 2
        %v627 = vadd.f32 %v625, %v626
        %v628 = vrot.slane %v627, 1
        %v629 = vadd.f32 %v627, %v628
        %v630 = vrot.slane %v617, 4
        %v631 = vadd.f32 %v617, %v630
        %v632 = vrot.slane %v631, 2
        %v633 = vadd.f32 %v631, %v632
        %v634 = vrot.slane %v633, 1
        %v635 = vadd.f32 %v633, %v634
        %v636 = vrot.slane %v618, 4
        %v637 = vadd.f32 %v618, %v636
        %v638 = vrot.slane %v637, 2
        %v639 = vadd.f32 %v637, %v638
        %v640 = vrot.slane %v639, 1
        %v641 = vadd.f32 %v639, %v640
        %v642 = vrot.slane %v619, 4
        %v643 = vadd.f32 %v619, %v642
        %v644 = vrot.slane %v643, 2
        %v645 = vadd.f32 %v643, %v644
        %v646 = vrot.slane %v645, 1
        %v647 = vadd.f32 %v645, %v646
        %v648 = vrot.slane %v620, 4
        %v649 = vadd.f32 %v620, %v648
        %v650 = vrot.slane %v649, 2
        %v651 = vadd.f32 %v649, %v650
        %v652 = vrot.slane %v651, 1
        %v653 = vadd.f32 %v651, %v652
        %v654 = vrot.slane %v621, 4
        %v655 = vadd.f32 %v621, %v654
        %v656 = vrot.slane %v655, 2
        %v657 = vadd.f32 %v655, %v656
        %v658 = vrot.slane %v657, 1
        %v659 = vadd.f32 %v657, %v658
        %v660 = vrot.slane %v622, 4
        %v661 = vadd.f32 %v622, %v660
        %v662 = vrot.slane %v661, 2
        %v663 = vadd.f32 %v661, %v662
        %v664 = vrot.slane %v663, 1
        %v665 = vadd.f32 %v663, %v664
        %v666 = vrot.slane %v623, 4
        %v667 = vadd.f32 %v623, %v666
        %v668 = vrot.slane %v667, 2
        %v669 = vadd.f32 %v667, %v668
        %v670 = vrot.slane %v669, 1
        %v671 = vadd.f32 %v669, %v670
        %v672 = vld [vmem:[%s4] sm:$0xff]
        %v673 = vld [vmem:[%s4 + $0x8] sm:$0xff]
        %v674 = vld [vmem:[%s4 + $0x10] sm:$0xff]
        %v675 = vld [vmem:[%s4 + $0x18] sm:$0xff]
        %v676 = vld [vmem:[%s4 + $0x20] sm:$0xff]
        %v677 = vld [vmem:[%s4 + $0x28] sm:$0xff]
        %v678 = vld [vmem:[%s4 + $0x30] sm:$0xff]
        %v679 = vld [vmem:[%s4 + $0x38] sm:$0xff]
        %v680 = vld [vmem:[%s4 + $0x40] sm:$0xff]
        %v681 = vld [vmem:[%s4 + $0x48] sm:$0xff]
        %v682 = vld [vmem:[%s4 + $0x50] sm:$0xff]
        %v683 = vld [vmem:[%s4 + $0x58] sm:$0xff]
        %v684 = vld [vmem:[%s4 + $0x60] sm:$0xff]
        %v685 = vld [vmem:[%s4 + $0x68] sm:$0xff]
        %v686 = vld [vmem:[%s4 + $0x70] sm:$0xff]
        %v687 = vld [vmem:[%s4 + $0x78] sm:$0xff]
        %v688 = vld [vmem:[%s5] sm:$0x1]
        %v690 = vlaneseq
        %v691 = vshrl.u32 %v690, 7
        %v692 = vsub.s32 0, %v691
        %v693 = vrot.slane %v688, %v692
        %vm703 = vcmask 1041409
        %v704 = vsel %vm703, %v635, %v629
        %vm705 = vcmask 1042434
        %v706 = vsel %vm705, %v641, %v704
        %vm707 = vcmask 1043459
        %v708 = vsel %vm707, %v647, %v706
        %vm709 = vcmask 1044484
        %v710 = vsel %vm709, %v653, %v708
        %vm711 = vcmask 1045509
        %v712 = vsel %vm711, %v659, %v710
        %vm713 = vcmask 1046534
        %v714 = vsel %vm713, %v665, %v712
        %vm715 = vcmask 1047559
        %v716 = vsel %vm715, %v671, %v714
        %718 = vmatprep.subr.mxu0 0.0
        %719 = vmatpush1.msra.mxu0 %v687
        %720 = vmatprep.subr.mxu0 0.0
        %721 = vmatpush1.msra.mxu0 %v686
        %722 = vmatprep.subr.mxu0 0.0
        %723 = vmatpush1.msra.mxu0 %v685
        %724 = vmatprep.subr.mxu0 0.0
        %725 = vmatpush1.msra.mxu0 %v684
        %726 = vmatprep.subr.mxu0 0.0
        %727 = vmatpush1.msra.mxu0 %v683
        %728 = vmatprep.subr.mxu0 0.0
        %729 = vmatpush1.msra.mxu0 %v682
        %730 = vmatprep.subr.mxu0 0.0
        %731 = vmatpush1.msra.mxu0 %v681
        %732 = vmatprep.subr.mxu0 0.0
        %733 = vmatpush1.msra.mxu0 %v680
        %734 = vmatprep.subr.mxu0 0.0
        %735 = vmatpush1.msra.mxu0 %v679
        %736 = vmatprep.subr.mxu0 0.0
        %737 = vmatpush1.msra.mxu0 %v678
        %738 = vmatprep.subr.mxu0 0.0
        %739 = vmatpush1.msra.mxu0 %v677
        %740 = vmatprep.subr.mxu0 0.0
        %741 = vmatpush1.msra.mxu0 %v676
        %742 = vmatprep.subr.mxu0 0.0
        %743 = vmatpush1.msra.mxu0 %v675
        %744 = vmatprep.subr.mxu0 0.0
        %745 = vmatpush1.msra.mxu0 %v674
        %746 = vmatprep.subr.mxu0 0.0
        %747 = vmatpush1.msra.mxu0 %v673
        %748 = vmatprep.subr.mxu0 0.0
        %749 = vmatpush1.msra.mxu0 %v672
        %750 = vmatprep.subr.mxu0 0.0
        %751 = vmatpush2.msra.mxu0 0.0
        %752 = vmatprep.subr.mxu0 0.0
        %753 = vmatpush2.msra.mxu0 0.0
        %754 = vmatprep.subr.mxu0 0.0
        %755 = vmatpush2.msra.mxu0 0.0
        %756 = vmatprep.subr.mxu0 0.0
        %757 = vmatpush2.msra.mxu0 0.0
        %758 = vmatprep.subr.mxu0 0.0
        %759 = vmatpush2.msra.mxu0 0.0
        %760 = vmatprep.subr.mxu0 0.0
        %761 = vmatpush2.msra.mxu0 0.0
        %762 = vmatprep.subr.mxu0 0.0
        %763 = vmatpush2.msra.mxu0 0.0
        %764 = vmatprep.subr.mxu0 0.0
        %765 = vmatpush2.msra.mxu0 0.0
        %766 = vmatprep.subr.mxu0 0.0
        %767 = vmatpush2.msra.mxu0 0.0
        %768 = vmatprep.subr.mxu0 0.0
        %769 = vmatpush2.msra.mxu0 0.0
        %770 = vmatprep.subr.mxu0 0.0
        %771 = vmatpush2.msra.mxu0 0.0
        %772 = vmatprep.subr.mxu0 0.0
        %773 = vmatpush2.msra.mxu0 0.0
        %774 = vmatprep.subr.mxu0 0.0
        %775 = vmatpush2.msra.mxu0 0.0
        %776 = vmatprep.subr.mxu0 0.0
        %777 = vmatpush2.msra.mxu0 0.0
        %778 = vmatprep.subr.mxu0 0.0
        %779 = vmatpush2.msra.mxu0 0.0
        %780 = vmatprep.subr.mxu0 0.0
        %781 = vmatpush2.msra.mxu0 0.0
        %782 = vmatprep.mubr.f32.mxu0 0.0
        %783 = vmatmul.mubr.f32.gmra.mxu0 %v716
        %v784 = vpop.f32.mrf.mxu0
        %v785 = vadd.f32 %v693, %v784
        %v786 = vpop.f32.mrf.mxu0
        %787 = vdwg.mxu0
        %788 = vst [vmem:[%s294] sm:$0xff] %v785
      $region52: #{_forward_impl.1} parent=43 // pred_fallthru
        _
      %p789 = scmp.lt.s32.totalorder %s21, 1
      %s790 = scalar_select %p789, %s21, 1
      %s791 = smul.addr %s790, 8
      %s792 = scalar_lea.vmem %s6, %s791
      // Predicated region
      $region53: #{_forward_impl.1} parent=43 // pred_check
        %p793 = pneg %p185
      $region54: #{_forward_impl.1} parent=43 // pred_check_branch
        %795 = sbr.rel (%p793) target = $region56
      $region55: #{_forward_impl.1} parent=43 // pred_region
        _
      $region56: #{_forward_impl.1} parent=43 // pred_fallthru
        _
    $region44: #{_forward_impl.1} parent=5 // pred_fallthru
      _
    %p796 = scmp.le.s32.totalorder 2, %s12
    // Predicated region
    $region57: #{_forward_impl.1} parent=5 // pred_check
      %p797 = pneg %p796
    $region58: #{_forward_impl.1} parent=5 // pred_check_branch
      %799 = sbr.rel (%p797) target = $region60
    $region59: #{_forward_impl.1} parent=5 // pred_region
      %s800 = ssub.s32 %s12, 2
      // Predicated region
      $region61: #{_forward_impl.1} parent=59 // pred_check
        %p801 = pneg %p191
      $region62: #{_forward_impl.1} parent=59 // pred_check_branch
        %803 = sbr.rel (%p801) target = $region64
      $region63: #{_forward_impl.1} parent=59 // pred_region
        %p804 = scmp.lt.s32.totalorder %s23, 1
        %s805 = scalar_select %p804, %s23, 1
        %s806 = smul.addr %s805, 8
        %s807 = scalar_lea.vmem %s6, %s806
      $region64: #{_forward_impl.1} parent=59 // pred_fallthru
        _
    $region60: #{_forward_impl.1} parent=5 // pred_fallthru
      _
  $region6: #{_forward_impl.1} parent=0 // loop_footer
    %s16 = sadd.s32 1, %s12
  $region7: #{_forward_impl.1} parent=0 // loop_footer_branch
    %11 = sbr.rel target = $region3
  $region8: #{_forward_impl.1} parent=0 // loop_exit
    _

// kernel: _forward_impl.1
$region0: #{_forward_impl.1}
  #allocation0 [shape = 'u32[]', space=smem, size = 0x4, offset = 0x4, fixed_abs, tag = 'smem constant byte address 0x4 - core index']
  #allocation1 [shape = 'u32[144,128]{1,0:T(1,128)}', space=vmem, size = 0x12000, scoped, tag = 'internal scratch']
  #allocation2 [shape = 'f32[64,128]{1,0:T(8,128)}', space=vmem, size = 0x8000, scoped, tag = 'scratch operand']
  %s0 = inlined_call_operand.vmem [shape: s32[2,128,1], index: 0, kind: input, shape index: {}]
  %s1 = inlined_call_operand.vmem [shape: f32[16,8], index: 1, kind: input, shape index: {}]
  %s2 = inlined_call_operand.vmem [shape: f32[2,24,128], index: 2, kind: input, shape index: {}]
  %s3 = inlined_call_operand.vmem [shape: f32[1,128], index: 3, kind: input, shape index: {}]
  %s4 = inlined_call_operand.vmem [shape: f32[128,128], index: 4, kind: input, shape index: {}]
  %s5 = inlined_call_operand.vmem [shape: f32[1,128], index: 5, kind: input, shape index: {}]
  %s6 = inlined_call_operand.vmem [shape: f32[16,128], index: 6, kind: output, shape index: {}]
  %s7 = sld [smem:[#allocation0]]
  $region65: #{_forward_impl.1} parent=0
    _
  %s9 = ssub.s32 1, %s7
  %s10 = scalar_select 0, %s9, %s7
  loop: start=0, step=1, limit=6
  $region2: #{_forward_impl.1} parent=0 // loop_pre_header
    _
  $region3: #{_forward_impl.1} parent=0 // loop_header
    %s12 = sphi 0, %s16
    %p13 = scmp.ge.s32.totalorder %s12, 6
    %s19 = sphi 0, %s31
    %s20 = sphi 0, %s27
    %s21 = sphi 0, %s19
    %s22 = sphi 0, %s20
    %s23 = sphi 0, %s21
    %s24 = sphi 0, %s22
    %s36 = sphi 0, %s38
    %s39 = sphi 0, %s36
    %s40 = sphi 0, %s39
    %s56 = sphi 0, %s40
    %s62 = sphi 0, %s64
    %s65 = sphi 0, %s62
    %s66 = sphi 0, %s65
    %s82 = sphi 0, %s66
    %s86 = sphi 0, %s86
    %s88 = sphi 0, %s86
    %s89 = sphi 0, %s88
    %s103 = sphi 0, %s89
    %s107 = sphi 0, %s107
    %s109 = sphi 0, %s107
    %s110 = sphi 0, %s109
    %s124 = sphi 0, %s110
    %s128 = sphi 0, %s128
    %s130 = sphi 0, %s128
    %s131 = sphi 0, %s130
    %s145 = sphi 0, %s131
    %s149 = sphi 0, %s149
    %s151 = sphi 0, %s149
    %s152 = sphi 0, %s151
    %s166 = sphi 0, %s152
    %s172 = sphi 0, %s174
    %s175 = sphi 0, %s172
    %s176 = sphi 0, %s175
    %s192 = sphi 0, %s176
  $region4: #{_forward_impl.1} parent=0 // loop_header_branch
    %15 = sbr.rel (%p13) target = $region8
  $region5: #{_forward_impl.1} parent=0 // loop_body
    %s17 = ssub.s32 %s12, 1
    %s18 = ssub.s32 %s12, 2
    %s25 = sadd.s32 1, %s20
    %p26 = scmp.ge.s32.totalorder %s25, 2
    %s27 = scalar_select %p26, 0, %s25
    %s28 = sadd.s32 1, %s19
    %s29 = scalar_select %p26, %s28, %s19
    %p30 = scmp.ge.s32.totalorder %s29, 2
    %s31 = scalar_select %p30, 0, %s29
    %s32 = ssub.s32 %s20, %s27
    %s33 = ssub.s32 %s19, %s31
    %s34 = sor.u32 %s32, %s33
    %p35 = scmp.eq.s32.totalorder %s34, 0
    %s37 = sadd.s32 %s36, 1
    %s38 = scalar_select %p35, %s36, %s37
    %p41 = pneg %p35
    %p42 = scmp.eq.s32.totalorder %s12, 3
    %p43 = por %p41, %p42
    %p44 = scmp.ne.s32.totalorder %s36, %s39
    %p45 = scmp.eq.s32.totalorder %s12, 0
    %p46 = por %p44, %p45
    %p47 = scmp.ne.s32.totalorder %s36, %s39
    %p48 = scmp.eq.s32.totalorder %s17, 3
    %p49 = por %p47, %p48
    %p50 = scmp.ne.s32.totalorder %s39, %s40
    %p51 = scmp.eq.s32.totalorder %s17, 0
    %p52 = por %p50, %p51
    %p53 = scmp.ne.s32.totalorder %s39, %s40
    %p54 = scmp.eq.s32.totalorder %s18, 3
    %p55 = por %p53, %p54
    %p57 = scmp.ne.s32.totalorder %s40, %s56
    %p58 = scmp.eq.s32.totalorder %s18, 0
    %p59 = por %p57, %p58
    %s60 = ssub.s32 %s19, %s31
    %p61 = scmp.eq.s32.totalorder %s60, 0
    %s63 = sadd.s32 %s62, 1
    %s64 = scalar_select %p61, %s62, %s63
    %p67 = pneg %p61
    %p68 = scmp.eq.s32.totalorder %s12, 3
    %p69 = por %p67, %p68
    %p70 = scmp.ne.s32.totalorder %s62, %s65
    %p71 = scmp.eq.s32.totalorder %s12, 0
    %p72 = por %p70, %p71
    %p73 = scmp.ne.s32.totalorder %s62, %s65
    %p74 = scmp.eq.s32.totalorder %s17, 3
    %p75 = por %p73, %p74
    %p76 = scmp.ne.s32.totalorder %s65, %s66
    %p77 = scmp.eq.s32.totalorder %s17, 0
    %p78 = por %p76, %p77
    %p79 = scmp.ne.s32.totalorder %s65, %s66
    %p80 = scmp.eq.s32.totalorder %s18, 3
    %p81 = por %p79, %p80
    %p83 = scmp.ne.s32.totalorder %s66, %s82
    %p84 = scmp.eq.s32.totalorder %s18, 0
    %p85 = por %p83, %p84
    %s87 = sadd.s32 %s86, 1
    %p90 = scmp.eq.s32.totalorder %s12, 3
    %p91 = scmp.ne.s32.totalorder %s86, %s88
    %p92 = scmp.eq.s32.totalorder %s12, 0
    %p93 = por %p91, %p92
    %p94 = scmp.ne.s32.totalorder %s86, %s88
    %p95 = scmp.eq.s32.totalorder %s17, 3
    %p96 = por %p94, %p95
    %p97 = scmp.ne.s32.totalorder %s88, %s89
    %p98 = scmp.eq.s32.totalorder %s17, 0
    %p99 = por %p97, %p98
    %p100 = scmp.ne.s32.totalorder %s88, %s89
    %p101 = scmp.eq.s32.totalorder %s18, 3
    %p102 = por %p100, %p101
    %p104 = scmp.ne.s32.totalorder %s89, %s103
    %p105 = scmp.eq.s32.totalorder %s18, 0
    %p106 = por %p104, %p105
    %s108 = sadd.s32 %s107, 1
    %p111 = scmp.eq.s32.totalorder %s12, 3
    %p112 = scmp.ne.s32.totalorder %s107, %s109
    %p113 = scmp.eq.s32.totalorder %s12, 0
    %p114 = por %p112, %p113
    %p115 = scmp.ne.s32.totalorder %s107, %s109
    %p116 = scmp.eq.s32.totalorder %s17, 3
    %p117 = por %p115, %p116
    %p118 = scmp.ne.s32.totalorder %s109, %s110
    %p119 = scmp.eq.s32.totalorder %s17, 0
    %p120 = por %p118, %p119
    %p121 = scmp.ne.s32.totalorder %s109, %s110
    %p122 = scmp.eq.s32.totalorder %s18, 3
    %p123 = por %p121, %p122
    %p125 = scmp.ne.s32.totalorder %s110, %s124
    %p126 = scmp.eq.s32.totalorder %s18, 0
    %p127 = por %p125, %p126
    %s129 = sadd.s32 %s128, 1
    %p132 = scmp.eq.s32.totalorder %s12, 3
    %p133 = scmp.ne.s32.totalorder %s128, %s130
    %p134 = scmp.eq.s32.totalorder %s12, 0
    %p135 = por %p133, %p134
    %p136 = scmp.ne.s32.totalorder %s128, %s130
    %p137 = scmp.eq.s32.totalorder %s17, 3
    %p138 = por %p136, %p137
    %p139 = scmp.ne.s32.totalorder %s130, %s131
    %p140 = scmp.eq.s32.totalorder %s17, 0
    %p141 = por %p139, %p140
    %p142 = scmp.ne.s32.totalorder %s130, %s131
    %p143 = scmp.eq.s32.totalorder %s18, 3
    %p144 = por %p142, %p143
    %p146 = scmp.ne.s32.totalorder %s131, %s145
    %p147 = scmp.eq.s32.totalorder %s18, 0
    %p148 = por %p146, %p147
    %s150 = sadd.s32 %s149, 1
    %p153 = scmp.eq.s32.totalorder %s12, 3
    %p154 = scmp.ne.s32.totalorder %s149, %s151
    %p155 = scmp.eq.s32.totalorder %s12, 0
    %p156 = por %p154, %p155
    %p157 = scmp.ne.s32.totalorder %s149, %s151
    %p158 = scmp.eq.s32.totalorder %s17, 3
    %p159 = por %p157, %p158
    %p160 = scmp.ne.s32.totalorder %s151, %s152
    %p161 = scmp.eq.s32.totalorder %s17, 0
    %p162 = por %p160, %p161
    %p163 = scmp.ne.s32.totalorder %s151, %s152
    %p164 = scmp.eq.s32.totalorder %s18, 3
    %p165 = por %p163, %p164
    %p167 = scmp.ne.s32.totalorder %s152, %s166
    %p168 = scmp.eq.s32.totalorder %s18, 0
    %p169 = por %p167, %p168
    %s170 = ssub.s32 %s19, %s31
    %p171 = scmp.eq.s32.totalorder %s170, 0
    %s173 = sadd.s32 %s172, 1
    %s174 = scalar_select %p171, %s172, %s173
    %p177 = pneg %p171
    %p178 = scmp.eq.s32.totalorder %s12, 3
    %p179 = por %p177, %p178
    %p180 = scmp.ne.s32.totalorder %s172, %s175
    %p181 = scmp.eq.s32.totalorder %s12, 0
    %p182 = por %p180, %p181
    %p183 = scmp.ne.s32.totalorder %s172, %s175
    %p184 = scmp.eq.s32.totalorder %s17, 3
    %p185 = por %p183, %p184
    %p186 = scmp.ne.s32.totalorder %s175, %s176
    %p187 = scmp.eq.s32.totalorder %s17, 0
    %p188 = por %p186, %p187
    %p189 = scmp.ne.s32.totalorder %s175, %s176
    %p190 = scmp.eq.s32.totalorder %s18, 3
    %p191 = por %p189, %p190
    %p193 = scmp.ne.s32.totalorder %s176, %s192
    %p194 = scmp.eq.s32.totalorder %s18, 0
    %p195 = por %p193, %p194
    %p196 = scmp.le.s32.totalorder 1, %s12
    %p197 = scmp.lt.s32.totalorder %s12, 5
    %p198 = pnand %p196, %p197
    %p199 = pneg %p198
    // Predicated region
    $region9: #{_forward_impl.1} parent=5 // pred_check
      _
    $region10: #{_forward_impl.1} parent=5 // pred_check_branch
      %201 = sbr.rel (%p198) target = $region12
    $region11: #{_forward_impl.1} parent=5 // pred_region
      %s202 = ssub.s32 %s12, 1
      // Predicated region
      $region13: #{_forward_impl.1} parent=11 // pred_check
        %p203 = pneg %p99
      $region14: #{_forward_impl.1} parent=11 // pred_check_branch
        %205 = sbr.rel (%p203) target = $region16
      $region15: #{_forward_impl.1} parent=11 // pred_region
        _
      $region16: #{_forward_impl.1} parent=11 // pred_fallthru
        _
      // Predicated region
      $region17: #{_forward_impl.1} parent=11 // pred_check
        %p206 = pneg %p120
      $region18: #{_forward_impl.1} parent=11 // pred_check_branch
        %208 = sbr.rel (%p206) target = $region20
      $region19: #{_forward_impl.1} parent=11 // pred_region
        _
      $region20: #{_forward_impl.1} parent=11 // pred_fallthru
        _
      // Predicated region
      $region21: #{_forward_impl.1} parent=11 // pred_check
        %p209 = pneg %p141
      $region22: #{_forward_impl.1} parent=11 // pred_check_branch
        %211 = sbr.rel (%p209) target = $region24
      $region23: #{_forward_impl.1} parent=11 // pred_region
        _
      $region24: #{_forward_impl.1} parent=11 // pred_fallthru
        _
      // Predicated region
      $region25: #{_forward_impl.1} parent=11 // pred_check
        %p212 = pneg %p162
      $region26: #{_forward_impl.1} parent=11 // pred_check_branch
        %214 = sbr.rel (%p212) target = $region28
      $region27: #{_forward_impl.1} parent=11 // pred_region
        _
      $region28: #{_forward_impl.1} parent=11 // pred_fallthru
        _
    $region12: #{_forward_impl.1} parent=5 // pred_fallthru
      _
    %p215 = scmp.lt.s32.totalorder %s12, 4
    // Predicated region
    $region29: #{_forward_impl.1} parent=5 // pred_check
      %p216 = pneg %p215
    $region30: #{_forward_impl.1} parent=5 // pred_check_branch
      %218 = sbr.rel (%p216) target = $region32
    $region31: #{_forward_impl.1} parent=5 // pred_region
      // Predicated region
      $region33: #{_forward_impl.1} parent=31 // pred_check
        %p219 = pneg %p46
      $region34: #{_forward_impl.1} parent=31 // pred_check_branch
        %221 = sbr.rel (%p219) target = $region36
      $region35: #{_forward_impl.1} parent=31 // pred_region
        %s222 = smul.u32 8, %s19
        %p223 = scmp.lt.s32.totalorder %s20, 1
        %s224 = scalar_select %p223, %s20, 1
        %p225 = scmp.lt.s32.totalorder %s222, 15
        %s226 = scalar_select %p225, %s222, 15
        %s227 = smul.addr %s224, 16
        %s228 = sadd.s32 %s226, %s227
        %s229 = smul.addr %s228, 8
        %s230 = scalar_lea.vmem %s0, %s229
        %s231 = smul.u32 8, %s19
      $region36: #{_forward_impl.1} parent=31 // pred_fallthru
        _
      // Predicated region
      $region37: #{_forward_impl.1} parent=31 // pred_check
        %p232 = pneg %p72
      $region38: #{_forward_impl.1} parent=31 // pred_check_branch
        %234 = sbr.rel (%p232) target = $region40
      $region39: #{_forward_impl.1} parent=31 // pred_region
        %p235 = scmp.lt.s32.totalorder %s19, 1
        %s236 = scalar_select %p235, %s19, 1
        %s237 = smul.addr %s236, 8
        %s238 = scalar_lea.vmem %s1, %s237
      $region40: #{_forward_impl.1} parent=31 // pred_fallthru
        _
    $region32: #{_forward_impl.1} parent=5 // pred_fallthru
      _
    %p239 = scmp.le.s32.totalorder 1, %s12
    %p240 = scmp.lt.s32.totalorder %s12, 5
    %p241 = pnand %p239, %p240
    %p242 = pneg %p241
    // Predicated region
    $region41: #{_forward_impl.1} parent=5 // pred_check
      _
    $region42: #{_forward_impl.1} parent=5 // pred_check_branch
      %244 = sbr.rel (%p241) target = $region44
    $region43: #{_forward_impl.1} parent=5 // pred_region
      %s245 = ssub.s32 %s12, 1
      %s246 = smul.u32 8, %s21
      %p247 = scmp.lt.s32.totalorder %s22, 1
      %s248 = scalar_select %p247, %s22, 1
      %p249 = scmp.lt.s32.totalorder %s246, 15
      %s250 = scalar_select %p249, %s246, 15
      %s251 = smul.addr %s248, 16
      %s252 = sadd.s32 %s250, %s251
      %s253 = smul.addr %s252, 8
      %s254 = scalar_lea.vmem %s0, %s253
      %p255 = pneg %p52
      %p256 = pneg %p49
      %p257 = scmp.lt.s32.totalorder %s21, 1
      %s258 = scalar_select %p257, %s21, 1
      %s259 = smul.addr %s258, 8
      %s260 = scalar_lea.vmem %s1, %s259
      %p261 = pneg %p78
      %p262 = pneg %p75
      %p263 = pneg %p99
      %p264 = pneg %p96
      %p265 = pneg %p120
      %p266 = pneg %p117
      %p267 = pneg %p141
      %p268 = pneg %p138
      %p269 = pneg %p162
      %p270 = pneg %p159
      %p271 = pneg %p188
      %p272 = pneg %p185
      %p273 = scmp.lt.s32.totalorder %s21, 1
      %s274 = scalar_select %p273, %s21, 1
      %s275 = smul.addr %s274, 8
      %s276 = scalar_lea.vmem %s6, %s275
      %s277 = smul.u32 8, %s21
      %p278 = scmp.lt.s32.totalorder %s22, 1
      %s279 = scalar_select %p278, %s22, 1
      %p280 = scmp.lt.s32.totalorder %s277, 15
      %s281 = scalar_select %p280, %s277, 15
      %s282 = smul.addr %s279, 16
      %s283 = sadd.s32 %s281, %s282
      %s284 = smul.addr %s283, 8
      %s285 = scalar_lea.vmem %s0, %s284
      %s286 = smul.u32 8, %s21
      %p287 = scmp.lt.s32.totalorder %s21, 1
      %s288 = scalar_select %p287, %s21, 1
      %s289 = smul.addr %s288, 8
      %s290 = scalar_lea.vmem %s1, %s289
      %p291 = scmp.lt.s32.totalorder %s21, 1
      %s292 = scalar_select %p291, %s21, 1
      %s293 = smul.addr %s292, 8
      %s294 = scalar_lea.vmem %s6, %s293
      %p295 = scmp.eq.s32.totalorder %s22, 0
      // Predicated region
      $region45: #{_forward_impl.1} parent=43 // pred_check
        %p296 = pneg %p295
      $region46: #{_forward_impl.1} parent=43 // pred_check_branch
        %298 = sbr.rel (%p296) target = $region48
      $region47: #{_forward_impl.1} parent=43 // pred_region
        %299 = vst [vmem:[#allocation2] sm:$0xff] 0.0
        %300 = vst [vmem:[#allocation2 + $0x8] sm:$0xff] 0.0
        %301 = vst [vmem:[#allocation2 + $0x10] sm:$0xff] 0.0
        %302 = vst [vmem:[#allocation2 + $0x18] sm:$0xff] 0.0
        %303 = vst [vmem:[#allocation2 + $0x20] sm:$0xff] 0.0
        %304 = vst [vmem:[#allocation2 + $0x28] sm:$0xff] 0.0
        %305 = vst [vmem:[#allocation2 + $0x30] sm:$0xff] 0.0
        %306 = vst [vmem:[#allocation2 + $0x38] sm:$0xff] 0.0
      $region48: #{_forward_impl.1} parent=43 // pred_fallthru
        _
      %v307 = vld [vmem:[%s285] sm:$0xff]
      %v308 = vld [vmem:[%s285 + $0x8] sm:$0xff]
      %v309 = vld [vmem:[%s285 + $0x10] sm:$0xff]
      %v310 = vld [vmem:[%s285 + $0x18] sm:$0xff]
      %v311 = vld [vmem:[%s285 + $0x20] sm:$0xff]
      %v312 = vld [vmem:[%s285 + $0x28] sm:$0xff]
      %v313 = vld [vmem:[%s285 + $0x30] sm:$0xff]
      %v314 = vld [vmem:[%s285 + $0x38] sm:$0xff]
      %v315 = vlaneseq
      %v316 = vand.u32 %v315, 127
      %317 = vset.pattern.permute.xlu0 0
      %318 = vperm.xlu0 %317, %v307
      %v319 = vpop.permute.xlu0 %318
      %320 = vset.pattern.permute.xlu0 0
      %321 = vperm.xlu0 %320, %v308
      %v322 = vpop.permute.xlu0 %321
      %323 = vset.pattern.permute.xlu0 0
      %324 = vperm.xlu0 %323, %v309
      %v325 = vpop.permute.xlu0 %324
      %326 = vset.pattern.permute.xlu0 0
      %327 = vperm.xlu0 %326, %v310
      %v328 = vpop.permute.xlu0 %327
      %329 = vset.pattern.permute.xlu0 0
      %330 = vperm.xlu0 %329, %v311
      %v331 = vpop.permute.xlu0 %330
      %332 = vset.pattern.permute.xlu0 0
      %333 = vperm.xlu0 %332, %v312
      %v334 = vpop.permute.xlu0 %333
      %335 = vset.pattern.permute.xlu0 0
      %336 = vperm.xlu0 %335, %v313
      %v337 = vpop.permute.xlu0 %336
      %338 = vset.pattern.permute.xlu0 0
      %339 = vperm.xlu0 %338, %v314
      %v340 = vpop.permute.xlu0 %339
      %vm341 = vcmp.eq.s32.totalorder %v319, %v316
      %vm342 = vcmp.eq.s32.totalorder %v322, %v316
      %vm343 = vcmp.eq.s32.totalorder %v325, %v316
      %vm344 = vcmp.eq.s32.totalorder %v328, %v316
      %vm345 = vcmp.eq.s32.totalorder %v331, %v316
      %vm346 = vcmp.eq.s32.totalorder %v334, %v316
      %vm347 = vcmp.eq.s32.totalorder %v337, %v316
      %vm348 = vcmp.eq.s32.totalorder %v340, %v316
      %v349 = vsel %vm341, 1, 0
      %v350 = vsel %vm342, 1, 0
      %v351 = vsel %vm343, 1, 0
      %v352 = vsel %vm344, 1, 0
      %v353 = vsel %vm345, 1, 0
      %v354 = vsel %vm346, 1, 0
      %v355 = vsel %vm347, 1, 0
      %v356 = vsel %vm348, 1, 0
      %v357 = vcvt.s32.f32 %v349
      %v358 = vcvt.s32.f32 %v350
      %v359 = vcvt.s32.f32 %v351
      %v360 = vcvt.s32.f32 %v352
      %v361 = vcvt.s32.f32 %v353
      %v362 = vcvt.s32.f32 %v354
      %v363 = vcvt.s32.f32 %v355
      %v364 = vcvt.s32.f32 %v356
      %s365 = smul.u32 %s22, 24
      %s366 = scalar_lea.vmem %s2, %s365
      %v367 = vld [vmem:[%s366] sm:$0xff]
      %v368 = vld [vmem:[%s366 + $0x8] sm:$0xff]
      %v369 = vld [vmem:[%s366 + $0x10] sm:$0xff]
      %v370 = vld [vmem:[#allocation2] sm:$0xff]
      %v371 = vld [vmem:[#allocation2 + $0x8] sm:$0xff]
      %v372 = vld [vmem:[#allocation2 + $0x10] sm:$0xff]
      %v373 = vld [vmem:[#allocation2 + $0x18] sm:$0xff]
      %v374 = vld [vmem:[#allocation2 + $0x20] sm:$0xff]
      %v375 = vld [vmem:[#allocation2 + $0x28] sm:$0xff]
      %v376 = vld [vmem:[#allocation2 + $0x30] sm:$0xff]
      %v377 = vld [vmem:[#allocation2 + $0x38] sm:$0xff]
      %vm378 = vcmask 195584
      %v380 = vsel %vm378, %v357, 0
      %v383 = vsel %vm378, %v358, 0
      %v386 = vsel %vm378, %v359, 0
      %v389 = vsel %vm378, %v360, 0
      %v392 = vsel %vm378, %v361, 0
      %v395 = vsel %vm378, %v362, 0
      %v398 = vsel %vm378, %v363, 0
      %v401 = vsel %vm378, %v364, 0
      %403 = vmatprep.subr.mxu0 0.0
      %404 = vmatpush1.msra.mxu0 0.0
      %405 = vmatprep.subr.mxu0 0.0
      %406 = vmatpush1.msra.mxu0 0.0
      %407 = vmatprep.subr.mxu0 0.0
      %408 = vmatpush1.msra.mxu0 0.0
      %409 = vmatprep.subr.mxu0 0.0
      %410 = vmatpush1.msra.mxu0 0.0
      %411 = vmatprep.subr.mxu0 0.0
      %412 = vmatpush1.msra.mxu0 0.0
      %413 = vmatprep.subr.mxu0 0.0
      %414 = vmatpush1.msra.mxu0 0.0
      %415 = vmatprep.subr.mxu0 0.0
      %416 = vmatpush1.msra.mxu0 0.0
      %417 = vmatprep.subr.mxu0 0.0
      %418 = vmatpush1.msra.mxu0 0.0
      %419 = vmatprep.subr.mxu0 0.0
      %420 = vmatpush1.msra.mxu0 0.0
      %421 = vmatprep.subr.mxu0 0.0
      %422 = vmatpush1.msra.mxu0 0.0
      %423 = vmatprep.subr.mxu0 0.0
      %424 = vmatpush1.msra.mxu0 0.0
      %425 = vmatprep.subr.mxu0 0.0
      %426 = vmatpush1.msra.mxu0 0.0
      %427 = vmatprep.subr.mxu0 0.0
      %428 = vmatpush1.msra.mxu0 0.0
      %429 = vmatprep.subr.mxu0 0.0
      %430 = vmatpush1.msra.mxu0 %v369
      %431 = vmatprep.subr.mxu0 0.0
      %432 = vmatpush1.msra.mxu0 %v368
      %433 = vmatprep.subr.mxu0 0.0
      %434 = vmatpush1.msra.mxu0 %v367
      %435 = vmatprep.subr.mxu0 0.0
      %436 = vmatpush2.msra.mxu0 0.0
      %437 = vmatprep.subr.mxu0 0.0
      %438 = vmatpush2.msra.mxu0 0.0
      %439 = vmatprep.subr.mxu0 0.0
      %440 = vmatpush2.msra.mxu0 0.0
      %441 = vmatprep.subr.mxu0 0.0
      %442 = vmatpush2.msra.mxu0 0.0
      %443 = vmatprep.subr.mxu0 0.0
      %444 = vmatpush2.msra.mxu0 0.0
      %445 = vmatprep.subr.mxu0 0.0
      %446 = vmatpush2.msra.mxu0 0.0
      %447 = vmatprep.subr.mxu0 0.0
      %448 = vmatpush2.msra.mxu0 0.0
      %449 = vmatprep.subr.mxu0 0.0
      %450 = vmatpush2.msra.mxu0 0.0
      %451 = vmatprep.subr.mxu0 0.0
      %452 = vmatpush2.msra.mxu0 0.0
      %453 = vmatprep.subr.mxu0 0.0
      %454 = vmatpush2.msra.mxu0 0.0
      %455 = vmatprep.subr.mxu0 0.0
      %456 = vmatpush2.msra.mxu0 0.0
      %457 = vmatprep.subr.mxu0 0.0
      %458 = vmatpush2.msra.mxu0 0.0
      %459 = vmatprep.subr.mxu0 0.0
      %460 = vmatpush2.msra.mxu0 0.0
      %461 = vmatprep.subr.mxu0 0.0
      %462 = vmatpush2.msra.mxu0 0.0
      %463 = vmatprep.subr.mxu0 0.0
      %464 = vmatpush2.msra.mxu0 0.0
      %465 = vmatprep.subr.mxu0 0.0
      %466 = vmatpush2.msra.mxu0 0.0
      %467 = vmatprep.mubr.f32.mxu0 0.0
      %468 = vmatmul.mubr.f32.gmra.mxu0 %v380
      %v469 = vpop.f32.mrf.mxu0
      %v470 = vadd.f32 0.0, %v469
      %v471 = vpop.f32.mrf.mxu0
      %472 = vmatprep.mubr.f32.mxu0 0.0
      %473 = vmatmul.mubr.f32.gmra.mxu0 %v383
      %v474 = vpop.f32.mrf.mxu0
      %v475 = vadd.f32 0.0, %v474
      %v476 = vpop.f32.mrf.mxu0
      %477 = vmatprep.mubr.f32.mxu0 0.0
      %478 = vmatmul.mubr.f32.gmra.mxu0 %v386
      %v479 = vpop.f32.mrf.mxu0
      %v480 = vadd.f32 0.0, %v479
      %v481 = vpop.f32.mrf.mxu0
      %482 = vmatprep.mubr.f32.mxu0 0.0
      %483 = vmatmul.mubr.f32.gmra.mxu0 %v389
      %v484 = vpop.f32.mrf.mxu0
      %v485 = vadd.f32 0.0, %v484
      %v486 = vpop.f32.mrf.mxu0
      %487 = vmatprep.mubr.f32.mxu0 0.0
      %488 = vmatmul.mubr.f32.gmra.mxu0 %v392
      %v489 = vpop.f32.mrf.mxu0
      %v490 = vadd.f32 0.0, %v489
      %v491 = vpop.f32.mrf.mxu0
      %492 = vmatprep.mubr.f32.mxu0 0.0
      %493 = vmatmul.mubr.f32.gmra.mxu0 %v395
      %v494 = vpop.f32.mrf.mxu0
      %v495 = vadd.f32 0.0, %v494
      %v496 = vpop.f32.mrf.mxu0
      %497 = vmatprep.mubr.f32.mxu0 0.0
      %498 = vmatmul.mubr.f32.gmra.mxu0 %v398
      %v499 = vpop.f32.mrf.mxu0
      %v500 = vadd.f32 0.0, %v499
      %v501 = vpop.f32.mrf.mxu0
      %502 = vmatprep.mubr.f32.mxu0 0.0
      %503 = vmatmul.mubr.f32.gmra.mxu0 %v401
      %v504 = vpop.f32.mrf.mxu0
      %v505 = vadd.f32 0.0, %v504
      %v506 = vpop.f32.mrf.mxu0
      %507 = vdwg.mxu0
      %v508 = vadd.f32 %v370, %v470
      %v509 = vadd.f32 %v371, %v475
      %v510 = vadd.f32 %v372, %v480
      %v511 = vadd.f32 %v373, %v485
      %v512 = vadd.f32 %v374, %v490
      %v513 = vadd.f32 %v375, %v495
      %v514 = vadd.f32 %v376, %v500
      %v515 = vadd.f32 %v377, %v505
      %516 = vst [vmem:[#allocation2] sm:$0xff] %v508
      %517 = vst [vmem:[#allocation2 + $0x8] sm:$0xff] %v509
      %518 = vst [vmem:[#allocation2 + $0x10] sm:$0xff] %v510
      %519 = vst [vmem:[#allocation2 + $0x18] sm:$0xff] %v511
      %520 = vst [vmem:[#allocation2 + $0x20] sm:$0xff] %v512
      %521 = vst [vmem:[#allocation2 + $0x28] sm:$0xff] %v513
      %522 = vst [vmem:[#allocation2 + $0x30] sm:$0xff] %v514
      %523 = vst [vmem:[#allocation2 + $0x38] sm:$0xff] %v515
      %p524 = scmp.eq.s32.totalorder %s22, 1
      // Predicated region
      $region49: #{_forward_impl.1} parent=43 // pred_check
        %p525 = pneg %p524
      $region50: #{_forward_impl.1} parent=43 // pred_check_branch
        %527 = sbr.rel (%p525) target = $region52
      $region51: #{_forward_impl.1} parent=43 // pred_region
        %v528 = vld [vmem:[#allocation2] sm:$0xff]
        %v529 = vld [vmem:[#allocation2 + $0x8] sm:$0xff]
        %v530 = vld [vmem:[#allocation2 + $0x10] sm:$0xff]
        %v531 = vld [vmem:[#allocation2 + $0x18] sm:$0xff]
        %v532 = vld [vmem:[#allocation2 + $0x20] sm:$0xff]
        %v533 = vld [vmem:[#allocation2 + $0x28] sm:$0xff]
        %v534 = vld [vmem:[#allocation2 + $0x30] sm:$0xff]
        %v535 = vld [vmem:[#allocation2 + $0x38] sm:$0xff]
        %v536 = vld [vmem:[%s3] sm:$0x1]
        %v538 = vlaneseq
        %v539 = vshrl.u32 %v538, 7
        %v540 = vsub.s32 0, %v539
        %v541 = vrot.slane %v536, %v540
        %v543 = vadd.f32 %v528, %v541
        %v544 = vadd.f32 %v529, %v541
        %v545 = vadd.f32 %v530, %v541
        %v546 = vadd.f32 %v531, %v541
        %v547 = vadd.f32 %v532, %v541
        %v548 = vadd.f32 %v533, %v541
        %v549 = vadd.f32 %v534, %v541
        %v550 = vadd.f32 %v535, %v541
        %v551 = vtanh.pop %v543
        %v552 = vtanh.pop %v544
        %v553 = vtanh.pop %v545
        %v554 = vtanh.pop %v546
        %v555 = vtanh.pop %v547
        %v556 = vtanh.pop %v548
        %v557 = vtanh.pop %v549
        %v558 = vtanh.pop %v550
        %v559 = vld [vmem:[%s290] sm:$0xff]
        %v560 = vlaneseq
        %v561 = vshrl.u32 %v560, 7
        %v562 = vsub.s32 0, %v561
        %v563 = vrot.slane %v559, %v562
        %565 = vbcast.lane.b32.xlu0 %v563, 256
        %v566 = vpop.permute.xlu0 %565
        %v567 = vlaneseq
        %v568 = vshrl.u32 %v567, 7
        %v569 = vsub.s32 1, %v568
        %v570 = vrot.slane %v559, %v569
        %572 = vbcast.lane.b32.xlu0 %v570, 256
        %v573 = vpop.permute.xlu0 %572
        %v574 = vlaneseq
        %v575 = vshrl.u32 %v574, 7
        %v576 = vsub.s32 2, %v575
        %v577 = vrot.slane %v559, %v576
        %579 = vbcast.lane.b32.xlu0 %v577, 256
        %v580 = vpop.permute.xlu0 %579
        %v581 = vlaneseq
        %v582 = vshrl.u32 %v581, 7
        %v583 = vsub.s32 3, %v582
        %v584 = vrot.slane %v559, %v583
        %586 = vbcast.lane.b32.xlu0 %v584, 256
        %v587 = vpop.permute.xlu0 %586
        %v588 = vlaneseq
        %v589 = vshrl.u32 %v588, 7
        %v590 = vsub.s32 4, %v589
        %v591 = vrot.slane %v559, %v590
        %593 = vbcast.lane.b32.xlu0 %v591, 256
        %v594 = vpop.permute.xlu0 %593
        %v595 = vlaneseq
        %v596 = vshrl.u32 %v595, 7
        %v597 = vsub.s32 5, %v596
        %v598 = vrot.slane %v559, %v597
        %600 = vbcast.lane.b32.xlu0 %v598, 256
        %v601 = vpop.permute.xlu0 %600
        %v602 = vlaneseq
        %v603 = vshrl.u32 %v602, 7
        %v604 = vsub.s32 6, %v603
        %v605 = vrot.slane %v559, %v604
        %607 = vbcast.lane.b32.xlu0 %v605, 256
        %v608 = vpop.permute.xlu0 %607
        %v609 = vlaneseq
        %v610 = vshrl.u32 %v609, 7
        %v611 = vsub.s32 7, %v610
        %v612 = vrot.slane %v559, %v611
        %614 = vbcast.lane.b32.xlu0 %v612, 256
        %v615 = vpop.permute.xlu0 %614
        %v616 = vmul.f32 %v551, %v566
        %v617 = vmul.f32 %v552, %v573
        %v618 = vmul.f32 %v553, %v580
        %v619 = vmul.f32 %v554, %v587
        %v620 = vmul.f32 %v555, %v594
        %v621 = vmul.f32 %v556, %v601
        %v622 = vmul.f32 %v557, %v608
        %v623 = vmul.f32 %v558, %v615
        %v624 = vrot.slane %v616, 4
        %v625 = vadd.f32 %v616, %v624
        %v626 = vrot.slane %v625, 2
        %v627 = vadd.f32 %v625, %v626
        %v628 = vrot.slane %v627, 1
        %v629 = vadd.f32 %v627, %v628
        %v630 = vrot.slane %v617, 4
        %v631 = vadd.f32 %v617, %v630
        %v632 = vrot.slane %v631, 2
        %v633 = vadd.f32 %v631, %v632
        %v634 = vrot.slane %v633, 1
        %v635 = vadd.f32 %v633, %v634
        %v636 = vrot.slane %v618, 4
        %v637 = vadd.f32 %v618, %v636
        %v638 = vrot.slane %v637, 2
        %v639 = vadd.f32 %v637, %v638
        %v640 = vrot.slane %v639, 1
        %v641 = vadd.f32 %v639, %v640
        %v642 = vrot.slane %v619, 4
        %v643 = vadd.f32 %v619, %v642
        %v644 = vrot.slane %v643, 2
        %v645 = vadd.f32 %v643, %v644
        %v646 = vrot.slane %v645, 1
        %v647 = vadd.f32 %v645, %v646
        %v648 = vrot.slane %v620, 4
        %v649 = vadd.f32 %v620, %v648
        %v650 = vrot.slane %v649, 2
        %v651 = vadd.f32 %v649, %v650
        %v652 = vrot.slane %v651, 1
        %v653 = vadd.f32 %v651, %v652
        %v654 = vrot.slane %v621, 4
        %v655 = vadd.f32 %v621, %v654
        %v656 = vrot.slane %v655, 2
        %v657 = vadd.f32 %v655, %v656
        %v658 = vrot.slane %v657, 1
        %v659 = vadd.f32 %v657, %v658
        %v660 = vrot.slane %v622, 4
        %v661 = vadd.f32 %v622, %v660
        %v662 = vrot.slane %v661, 2
        %v663 = vadd.f32 %v661, %v662
        %v664 = vrot.slane %v663, 1
        %v665 = vadd.f32 %v663, %v664
        %v666 = vrot.slane %v623, 4
        %v667 = vadd.f32 %v623, %v666
        %v668 = vrot.slane %v667, 2
        %v669 = vadd.f32 %v667, %v668
        %v670 = vrot.slane %v669, 1
        %v671 = vadd.f32 %v669, %v670
        %v672 = vld [vmem:[%s4] sm:$0xff]
        %v673 = vld [vmem:[%s4 + $0x8] sm:$0xff]
        %v674 = vld [vmem:[%s4 + $0x10] sm:$0xff]
        %v675 = vld [vmem:[%s4 + $0x18] sm:$0xff]
        %v676 = vld [vmem:[%s4 + $0x20] sm:$0xff]
        %v677 = vld [vmem:[%s4 + $0x28] sm:$0xff]
        %v678 = vld [vmem:[%s4 + $0x30] sm:$0xff]
        %v679 = vld [vmem:[%s4 + $0x38] sm:$0xff]
        %v680 = vld [vmem:[%s4 + $0x40] sm:$0xff]
        %v681 = vld [vmem:[%s4 + $0x48] sm:$0xff]
        %v682 = vld [vmem:[%s4 + $0x50] sm:$0xff]
        %v683 = vld [vmem:[%s4 + $0x58] sm:$0xff]
        %v684 = vld [vmem:[%s4 + $0x60] sm:$0xff]
        %v685 = vld [vmem:[%s4 + $0x68] sm:$0xff]
        %v686 = vld [vmem:[%s4 + $0x70] sm:$0xff]
        %v687 = vld [vmem:[%s4 + $0x78] sm:$0xff]
        %v688 = vld [vmem:[%s5] sm:$0x1]
        %v690 = vlaneseq
        %v691 = vshrl.u32 %v690, 7
        %v692 = vsub.s32 0, %v691
        %v693 = vrot.slane %v688, %v692
        %vm703 = vcmask 1041409
        %v704 = vsel %vm703, %v635, %v629
        %vm705 = vcmask 1042434
        %v706 = vsel %vm705, %v641, %v704
        %vm707 = vcmask 1043459
        %v708 = vsel %vm707, %v647, %v706
        %vm709 = vcmask 1044484
        %v710 = vsel %vm709, %v653, %v708
        %vm711 = vcmask 1045509
        %v712 = vsel %vm711, %v659, %v710
        %vm713 = vcmask 1046534
        %v714 = vsel %vm713, %v665, %v712
        %vm715 = vcmask 1047559
        %v716 = vsel %vm715, %v671, %v714
        %718 = vmatprep.subr.mxu0 0.0
        %719 = vmatpush1.msra.mxu0 %v687
        %720 = vmatprep.subr.mxu0 0.0
        %721 = vmatpush1.msra.mxu0 %v686
        %722 = vmatprep.subr.mxu0 0.0
        %723 = vmatpush1.msra.mxu0 %v685
        %724 = vmatprep.subr.mxu0 0.0
        %725 = vmatpush1.msra.mxu0 %v684
        %726 = vmatprep.subr.mxu0 0.0
        %727 = vmatpush1.msra.mxu0 %v683
        %728 = vmatprep.subr.mxu0 0.0
        %729 = vmatpush1.msra.mxu0 %v682
        %730 = vmatprep.subr.mxu0 0.0
        %731 = vmatpush1.msra.mxu0 %v681
        %732 = vmatprep.subr.mxu0 0.0
        %733 = vmatpush1.msra.mxu0 %v680
        %734 = vmatprep.subr.mxu0 0.0
        %735 = vmatpush1.msra.mxu0 %v679
        %736 = vmatprep.subr.mxu0 0.0
        %737 = vmatpush1.msra.mxu0 %v678
        %738 = vmatprep.subr.mxu0 0.0
        %739 = vmatpush1.msra.mxu0 %v677
        %740 = vmatprep.subr.mxu0 0.0
        %741 = vmatpush1.msra.mxu0 %v676
        %742 = vmatprep.subr.mxu0 0.0
        %743 = vmatpush1.msra.mxu0 %v675
        %744 = vmatprep.subr.mxu0 0.0
        %745 = vmatpush1.msra.mxu0 %v674
        %746 = vmatprep.subr.mxu0 0.0
        %747 = vmatpush1.msra.mxu0 %v673
        %748 = vmatprep.subr.mxu0 0.0
        %749 = vmatpush1.msra.mxu0 %v672
        %750 = vmatprep.subr.mxu0 0.0
        %751 = vmatpush2.msra.mxu0 0.0
        %752 = vmatprep.subr.mxu0 0.0
        %753 = vmatpush2.msra.mxu0 0.0
        %754 = vmatprep.subr.mxu0 0.0
        %755 = vmatpush2.msra.mxu0 0.0
        %756 = vmatprep.subr.mxu0 0.0
        %757 = vmatpush2.msra.mxu0 0.0
        %758 = vmatprep.subr.mxu0 0.0
        %759 = vmatpush2.msra.mxu0 0.0
        %760 = vmatprep.subr.mxu0 0.0
        %761 = vmatpush2.msra.mxu0 0.0
        %762 = vmatprep.subr.mxu0 0.0
        %763 = vmatpush2.msra.mxu0 0.0
        %764 = vmatprep.subr.mxu0 0.0
        %765 = vmatpush2.msra.mxu0 0.0
        %766 = vmatprep.subr.mxu0 0.0
        %767 = vmatpush2.msra.mxu0 0.0
        %768 = vmatprep.subr.mxu0 0.0
        %769 = vmatpush2.msra.mxu0 0.0
        %770 = vmatprep.subr.mxu0 0.0
        %771 = vmatpush2.msra.mxu0 0.0
        %772 = vmatprep.subr.mxu0 0.0
        %773 = vmatpush2.msra.mxu0 0.0
        %774 = vmatprep.subr.mxu0 0.0
        %775 = vmatpush2.msra.mxu0 0.0
        %776 = vmatprep.subr.mxu0 0.0
        %777 = vmatpush2.msra.mxu0 0.0
        %778 = vmatprep.subr.mxu0 0.0
        %779 = vmatpush2.msra.mxu0 0.0
        %780 = vmatprep.subr.mxu0 0.0
        %781 = vmatpush2.msra.mxu0 0.0
        %782 = vmatprep.mubr.f32.mxu0 0.0
        %783 = vmatmul.mubr.f32.gmra.mxu0 %v716
        %v784 = vpop.f32.mrf.mxu0
        %v785 = vadd.f32 %v693, %v784
        %v786 = vpop.f32.mrf.mxu0
        %787 = vdwg.mxu0
        %788 = vst [vmem:[%s294] sm:$0xff] %v785
      $region52: #{_forward_impl.1} parent=43 // pred_fallthru
        _
      %p789 = scmp.lt.s32.totalorder %s21, 1
      %s790 = scalar_select %p789, %s21, 1
      %s791 = smul.addr %s790, 8
      %s792 = scalar_lea.vmem %s6, %s791
      // Predicated region
      $region53: #{_forward_impl.1} parent=43 // pred_check
        %p793 = pneg %p185
      $region54: #{_forward_impl.1} parent=43 // pred_check_branch
        %795 = sbr.rel (%p793) target = $region56
      $region55: #{_forward_impl.1} parent=43 // pred_region
        _
      $region56: #{_forward_impl.1} parent=43 // pred_fallthru
        _
    $region44: #{_forward_impl.1} parent=5 // pred_fallthru
      _
    %p796 = scmp.le.s32.totalorder 2, %s12
    // Predicated region
    $region57: #{_forward_impl.1} parent=5 // pred_check
      %p797 = pneg %p796
    $region58: #{_forward_impl.1} parent=5 // pred_check_branch
      %799 = sbr.rel (%p797) target = $region60
    $region59: #{_forward_impl.1} parent=5 // pred_region
      %s800 = ssub.s32 %s12, 2
      // Predicated region
      $region61: #{_forward_impl.1} parent=59 // pred_check
        %p801 = pneg %p191
      $region62: #{_forward_impl.1} parent=59 // pred_check_branch
        %803 = sbr.rel (%p801) target = $region64
      $region63: #{_forward_impl.1} parent=59 // pred_region
        %p804 = scmp.lt.s32.totalorder %s23, 1
        %s805 = scalar_select %p804, %s23, 1
        %s806 = smul.addr %s805, 8
        %s807 = scalar_lea.vmem %s6, %s806
      $region64: #{_forward_impl.1} parent=59 // pred_fallthru
        _
    $region60: #{_forward_impl.1} parent=5 // pred_fallthru
      _
  $region6: #{_forward_impl.1} parent=0 // loop_footer
    %s16 = sadd.s32 1, %s12
  $region7: #{_forward_impl.1} parent=0 // loop_footer_branch
    %11 = sbr.rel target = $region3
  $region8: #{_forward_impl.1} parent=0 // loop_exit
    _

</llo_original>
